<compile_context>
chip_gen: v7x
topology: tpu7x:2x2x1
jax: 0.10.0
libtpu: 0.0.40
codegen_flags: <defaults>
</compile_context>

<pallas_src>
import jax
import jax.numpy as jnp
from jax.experimental import pallas as pl
from jax.experimental.pallas import tpu as pltpu

H1, H2, N_ATOMS = 400, 300, 51              # logical sizes from the PyTorch module
H1_PAD, H2_PAD, OUT_PAD = 512, 384, 128     # lane-aligned padded sizes


def _round_up(n, m):
    return (n + m - 1) // m * m


def _cdiv(a, b):
    return (a + b - 1) // b


def _choose_tiling(B, max_tile=1024):
    """Pick (tile_b, b_pad): 16-row aligned (bf16 sublane pack), large tiles to
    amortize the ~0.35us per-grid-step overhead, and >=2 grid steps when the
    batch is big enough so v7x's two TensorCores both get work."""
    b_min = _round_up(max(B, 1), 16)
    n_tiles = _cdiv(b_min, max_tile)
    if n_tiles == 1 and b_min >= 512:
        n_tiles = 2                      # megacore: keep 2 parallel grid steps
    tile_b = _round_up(_cdiv(b_min, n_tiles), 16)
    b_pad = tile_b * _cdiv(b_min, tile_b)
    return tile_b, b_pad


def critic_kernel(x_ref, a_ref, w1_ref, b1_ref, w2h_ref, w2a_ref, b2_ref,
                  w3_ref, b3_ref, out_ref):
    cdt = w1_ref.dtype  # matmul operand dtype (bf16 or f32); accumulation is f32

    # Layer 1: relu(x @ W1 + b1) -> (TILE_B, 512); padded columns stay exactly 0.
    h1 = jnp.dot(x_ref[...], w1_ref[...], preferred_element_type=jnp.float32)
    h1 = jnp.maximum(h1 + b1_ref[...], 0.0)

    # Layer 2: relu(cat([h1, a]) @ W2 + b2) as two dots (no concat buffer):
    #   h1 @ W2[:400]  (K=512, lane-aligned)  +  a @ W2[400:]  (K=action_dim)
    h2 = jnp.dot(h1.astype(cdt), w2h_ref[...], preferred_element_type=jnp.float32)
    h2 = h2 + jnp.dot(a_ref[...], w2a_ref[...], preferred_element_type=jnp.float32)
    h2 = jnp.maximum(h2 + b2_ref[...], 0.0)                          # (TILE_B, 384)

    # Head: lane-dense (TILE_B, 128) logits.  Padded output lanes have W3 rows
    # of 0 and b3 = -1e30 baked in, so exp() drives them to exactly 0.
    logits = jnp.dot(h2.astype(cdt), w3_ref[...],
                     preferred_element_type=jnp.float32) + b3_ref[...]
    m = jnp.max(logits, axis=-1, keepdims=True)
    e = jnp.exp(logits - m)
    denom = jnp.sum(e, axis=-1, keepdims=True)
    out_ref[...] = (e / denom).astype(out_ref.dtype)   # exact normalization


def critic_forward(x, a, params, *, max_tile_b=1024, out_dtype=jnp.float32):
    """x: (B, state_dim), a: (B, action_dim) -> softmax probs (B, 51)."""
    B, state_dim = x.shape
    action_dim = a.shape[1]
    cdt = params["w1"].dtype
    assert params["w1"].shape[0] == state_dim
    assert params["w2a"].shape[0] == action_dim

    tile_b, b_pad = _choose_tiling(B, max_tile_b)

    # Skip the pad/copy entirely when the caller's batch is already aligned.
    if B == b_pad and x.dtype == cdt and a.dtype == cdt:
        xp, ap = x, a
    else:
        xp = jnp.zeros((b_pad, state_dim), cdt).at[:B].set(x.astype(cdt))
        ap = jnp.zeros((b_pad, action_dim), cdt).at[:B].set(a.astype(cdt))

    const = lambda i: (0, 0)   # weights: same block every step -> resident in VMEM
    batch = lambda i: (i, 0)

    out = pl.pallas_call(
        critic_kernel,
        out_shape=jax.ShapeDtypeStruct((b_pad, OUT_PAD), out_dtype),
        grid=(b_pad // tile_b,),
        in_specs=[
            pl.BlockSpec((tile_b, state_dim), batch),    # x
            pl.BlockSpec((tile_b, action_dim), batch),   # a (unpadded)
            pl.BlockSpec((state_dim, H1_PAD), const),    # W1
            pl.BlockSpec((1, H1_PAD), const),            # b1
            pl.BlockSpec((H1_PAD, H2_PAD), const),       # W2 rows hit by h1
            pl.BlockSpec((action_dim, H2_PAD), const),   # W2 rows hit by a
            pl.BlockSpec((1, H2_PAD), const),            # b2
            pl.BlockSpec((H2_PAD, OUT_PAD), const),      # W3 (lane-padded head)
            pl.BlockSpec((1, OUT_PAD), const),           # b3 (mask baked into pad)
        ],
        out_specs=pl.BlockSpec((tile_b, OUT_PAD), batch),
        compiler_params=pltpu.CompilerParams(dimension_semantics=("parallel",)),
    )(xp, ap,
      params["w1"], params["b1"],
      params["w2h"], params["w2a"], params["b2"],
      params["w3"], params["b3"])

    return out[:B, :N_ATOMS]


def init_params(key, state_dim, action_dim, compute_dtype=jnp.bfloat16):
    """nn.Linear-style U(-1/sqrt(fan_in), 1/sqrt(fan_in)) init.

    Returns (padded params for the kernel, raw f32 params for the reference).
    bf16 is a good MXU operand dtype on all of v5e/v6e/v7x; accumulation and
    the elementwise path stay f32.
    """
    ks = jax.random.split(key, 6)

    def linear(kw, kb, fan_in, fan_out):
        bound = float(fan_in) ** -0.5
        w = jax.random.uniform(kw, (fan_in, fan_out), jnp.float32, -bound, bound)
        b = jax.random.uniform(kb, (fan_out,), jnp.float32, -bound, bound)
        return w, b

    w1, b1 = linear(ks[0], ks[1], state_dim, H1)
    w2, b2 = linear(ks[2], ks[3], H1 + action_dim, H2)
    w3, b3 = linear(ks[4], ks[5], H2, N_ATOMS)
    raw = {"w1": w1, "b1": b1, "w2": w2, "b2": b2, "w3": w3, "b3": b3}

    # Zero-padded, lane-aligned layouts for the kernel.
    w1p = jnp.zeros((state_dim, H1_PAD), jnp.float32).at[:, :H1].set(w1)
    b1p = jnp.zeros((1, H1_PAD), jnp.float32).at[:, :H1].set(b1)
    w2hp = jnp.zeros((H1_PAD, H2_PAD), jnp.float32).at[:H1, :H2].set(w2[:H1])
    w2ap = jnp.zeros((action_dim, H2_PAD), jnp.float32).at[:, :H2].set(w2[H1:])
    b2p = jnp.zeros((1, H2_PAD), jnp.float32).at[:, :H2].set(b2)
    w3p = jnp.zeros((H2_PAD, OUT_PAD), jnp.float32).at[:H2, :N_ATOMS].set(w3)
    # Softmax mask baked into the padded bias lanes: exp(-1e30 - m) == 0.
    b3p = jnp.full((1, OUT_PAD), -1e30, jnp.float32).at[:, :N_ATOMS].set(b3)

    padded = {
        "w1": w1p.astype(compute_dtype), "b1": b1p,     # biases stay f32
        "w2h": w2hp.astype(compute_dtype),
        "w2a": w2ap.astype(compute_dtype), "b2": b2p,
        "w3": w3p.astype(compute_dtype), "b3": b3p,
    }
    return padded, raw


def critic_ref(x, a, raw):
    h1 = jax.nn.relu(x @ raw["w1"] + raw["b1"])
    h2 = jax.nn.relu(jnp.concatenate([h1, a], axis=1) @ raw["w2"] + raw["b2"])
    logits = h2 @ raw["w3"] + raw["b3"]
    return jax.nn.softmax(logits, axis=-1)


def get_z_atoms(vmin, vmax):
    return jnp.linspace(vmin, vmax, N_ATOMS)


if __name__ == "__main__":
    B, STATE_DIM, ACTION_DIM = 2, 16, 4

    key = jax.random.PRNGKey(0)
    kx, ka, kp = jax.random.split(key, 3)
    x = jax.random.normal(kx, (B, STATE_DIM), jnp.float32)
    a = jax.random.normal(ka, (B, ACTION_DIM), jnp.float32)

    # f32-operand path: tight check of padding / split-W2 / softmax logic.
    p32, raw = init_params(kp, STATE_DIM, ACTION_DIM, compute_dtype=jnp.float32)
    out32 = jax.block_until_ready(critic_forward(x, a, p32))
    expected = critic_ref(x, a, raw)
    assert out32.shape == (B, N_ATOMS)
    assert jnp.allclose(jnp.sum(out32, axis=-1), 1.0, atol=1e-3)
    assert jnp.allclose(out32, expected, atol=2e-3, rtol=2e-3)

    # bf16 MXU-operand path with bf16 output store (recommended on TPU),
    # f32 accumulation throughout.
    pbf, _ = init_params(kp, STATE_DIM, ACTION_DIM, compute_dtype=jnp.bfloat16)
    outbf = jax.block_until_ready(
        critic_forward(x, a, pbf, out_dtype=jnp.bfloat16))
    assert outbf.shape == (B, N_ATOMS)
    assert jnp.allclose(jnp.sum(outbf.astype(jnp.float32), axis=-1), 1.0, atol=2e-2)
    assert jnp.allclose(outbf.astype(jnp.float32), expected, atol=2e-2)

    print("KERNEL_OK")
</pallas_src>

<mosaic_0001>
module attributes {stable_mosaic.version = 11 : i64} {
  func.func @critic_kernel(%arg0: i32, %arg1: memref<16x16xf32, #tpu.memory_space<vmem>>, %arg2: memref<16x4xf32, #tpu.memory_space<vmem>>, %arg3: memref<16x512xf32, #tpu.memory_space<vmem>>, %arg4: memref<1x512xf32, #tpu.memory_space<vmem>>, %arg5: memref<512x384xf32, #tpu.memory_space<vmem>>, %arg6: memref<4x384xf32, #tpu.memory_space<vmem>>, %arg7: memref<1x384xf32, #tpu.memory_space<vmem>>, %arg8: memref<384x128xf32, #tpu.memory_space<vmem>>, %arg9: memref<1x128xf32, #tpu.memory_space<vmem>>, %arg10: memref<16x128xf32, #tpu.memory_space<vmem>>) attributes {dimension_semantics = [#tpu.dimension_semantics<parallel>], iteration_bounds = array<i64: 1>, scalar_prefetch = 0 : i64, scratch_operands = 0 : i64, tpu.core_type = #tpu.core_type<tc>, window_params = [{transform_indices = @transform_0, window_bounds = array<i64: 16, 16>}, {transform_indices = @transform_1, window_bounds = array<i64: 16, 4>}, {pipeline_mode = #tpu.pipeline_mode<synchronous>, transform_indices = @transform_2, window_bounds = array<i64: 16, 512>}, {pipeline_mode = #tpu.pipeline_mode<synchronous>, transform_indices = @transform_3, window_bounds = array<i64: 1, 512>}, {pipeline_mode = #tpu.pipeline_mode<synchronous>, transform_indices = @transform_4, window_bounds = array<i64: 512, 384>}, {pipeline_mode = #tpu.pipeline_mode<synchronous>, transform_indices = @transform_5, window_bounds = array<i64: 4, 384>}, {pipeline_mode = #tpu.pipeline_mode<synchronous>, transform_indices = @transform_6, window_bounds = array<i64: 1, 384>}, {pipeline_mode = #tpu.pipeline_mode<synchronous>, transform_indices = @transform_7, window_bounds = array<i64: 384, 128>}, {pipeline_mode = #tpu.pipeline_mode<synchronous>, transform_indices = @transform_8, window_bounds = array<i64: 1, 128>}, {transform_indices = @transform_9, window_bounds = array<i64: 16, 128>}]} {
    %c0 = arith.constant 0 : index
    %c0_0 = arith.constant 0 : index
    %0 = vector.load %arg1[%c0, %c0_0] : memref<16x16xf32, #tpu.memory_space<vmem>>, vector<16x16xf32>
    %c0_1 = arith.constant 0 : index
    %c0_2 = arith.constant 0 : index
    %1 = vector.load %arg3[%c0_1, %c0_2] : memref<16x512xf32, #tpu.memory_space<vmem>>, vector<16x512xf32>
    %cst = arith.constant dense<0.000000e+00> : vector<16x512xf32>
    %2 = tpu.matmul %0, %1, %cst {dimension_numbers = #tpu.dot_dimension_numbers<[1], [0], [0], [1], [0, 0, 1, 1], [], []>} : vector<16x16xf32>, vector<16x512xf32>, vector<16x512xf32> -> vector<16x512xf32>
    %c0_3 = arith.constant 0 : index
    %c0_4 = arith.constant 0 : index
    %3 = vector.load %arg4[%c0_3, %c0_4] : memref<1x512xf32, #tpu.memory_space<vmem>>, vector<1x512xf32>
    %4 = vector.broadcast %3 : vector<1x512xf32> to vector<16x512xf32>
    %5 = arith.addf %2, %4 : vector<16x512xf32>
    %cst_5 = arith.constant 0.000000e+00 : f32
    %6 = vector.broadcast %cst_5 : f32 to vector<16x512xf32>
    %7 = arith.maximumf %5, %6 : vector<16x512xf32>
    %c0_6 = arith.constant 0 : index
    %c0_7 = arith.constant 0 : index
    %8 = vector.load %arg5[%c0_6, %c0_7] : memref<512x384xf32, #tpu.memory_space<vmem>>, vector<512x384xf32>
    %cst_8 = arith.constant dense<0.000000e+00> : vector<16x384xf32>
    %9 = tpu.matmul %7, %8, %cst_8 {dimension_numbers = #tpu.dot_dimension_numbers<[1], [0], [0], [1], [0, 0, 1, 1], [], []>} : vector<16x512xf32>, vector<512x384xf32>, vector<16x384xf32> -> vector<16x384xf32>
    %c0_9 = arith.constant 0 : index
    %c0_10 = arith.constant 0 : index
    %10 = vector.load %arg2[%c0_9, %c0_10] : memref<16x4xf32, #tpu.memory_space<vmem>>, vector<16x4xf32>
    %c0_11 = arith.constant 0 : index
    %c0_12 = arith.constant 0 : index
    %11 = vector.load %arg6[%c0_11, %c0_12] : memref<4x384xf32, #tpu.memory_space<vmem>>, vector<4x384xf32>
    %cst_13 = arith.constant dense<0.000000e+00> : vector<16x384xf32>
    %12 = tpu.matmul %10, %11, %cst_13 {dimension_numbers = #tpu.dot_dimension_numbers<[1], [0], [0], [1], [0, 0, 1, 1], [], []>} : vector<16x4xf32>, vector<4x384xf32>, vector<16x384xf32> -> vector<16x384xf32>
    %13 = arith.addf %9, %12 : vector<16x384xf32>
    %c0_14 = arith.constant 0 : index
    %c0_15 = arith.constant 0 : index
    %14 = vector.load %arg7[%c0_14, %c0_15] : memref<1x384xf32, #tpu.memory_space<vmem>>, vector<1x384xf32>
    %15 = vector.broadcast %14 : vector<1x384xf32> to vector<16x384xf32>
    %16 = arith.addf %13, %15 : vector<16x384xf32>
    %cst_16 = arith.constant 0.000000e+00 : f32
    %17 = vector.broadcast %cst_16 : f32 to vector<16x384xf32>
    %18 = arith.maximumf %16, %17 : vector<16x384xf32>
    %c0_17 = arith.constant 0 : index
    %c0_18 = arith.constant 0 : index
    %19 = vector.load %arg8[%c0_17, %c0_18] : memref<384x128xf32, #tpu.memory_space<vmem>>, vector<384x128xf32>
    %cst_19 = arith.constant dense<0.000000e+00> : vector<16x128xf32>
    %20 = tpu.matmul %18, %19, %cst_19 {dimension_numbers = #tpu.dot_dimension_numbers<[1], [0], [0], [1], [0, 0, 1, 1], [], []>} : vector<16x384xf32>, vector<384x128xf32>, vector<16x128xf32> -> vector<16x128xf32>
    %c0_20 = arith.constant 0 : index
    %c0_21 = arith.constant 0 : index
    %21 = vector.load %arg9[%c0_20, %c0_21] : memref<1x128xf32, #tpu.memory_space<vmem>>, vector<1x128xf32>
    %22 = vector.broadcast %21 : vector<1x128xf32> to vector<16x128xf32>
    %23 = arith.addf %20, %22 : vector<16x128xf32>
    %cst_22 = arith.constant dense<0xFF800000> : vector<16xf32>
    %24 = vector.multi_reduction <maximumf>, %23, %cst_22 [1] : vector<16x128xf32> to vector<16xf32>
    %25 = vector.shape_cast %24 : vector<16xf32> to vector<16x1xf32>
    %26 = vector.broadcast %25 : vector<16x1xf32> to vector<16x128xf32>
    %27 = arith.subf %23, %26 : vector<16x128xf32>
    %28 = math.exp %27 : vector<16x128xf32>
    %cst_23 = arith.constant dense<0.000000e+00> : vector<16xf32>
    %29 = vector.multi_reduction <add>, %28, %cst_23 [1] : vector<16x128xf32> to vector<16xf32>
    %30 = vector.shape_cast %29 : vector<16xf32> to vector<16x1xf32>
    %31 = vector.broadcast %30 : vector<16x1xf32> to vector<16x128xf32>
    %32 = arith.divf %28, %31 : vector<16x128xf32>
    %c0_24 = arith.constant 0 : index
    %c0_25 = arith.constant 0 : index
    %33 = vector.load %arg10[%c0_24, %c0_25] : memref<16x128xf32, #tpu.memory_space<vmem>>, vector<16x128xf32>
    tpu.vector_store %arg10[%c0_24, %c0_25], %32 {strides = array<i32>} : memref<16x128xf32, #tpu.memory_space<vmem>>, vector<16x128xf32>,
    return
  }
  func.func @transform_0(%arg0: i32) -> (i32, i32) {
    %c0_i32 = arith.constant 0 : i32
    %c0_i32_0 = arith.constant 0 : i32
    return %arg0, %c0_i32 : i32, i32
  }
  func.func @transform_1(%arg0: i32) -> (i32, i32) {
    %c0_i32 = arith.constant 0 : i32
    %c0_i32_0 = arith.constant 0 : i32
    return %arg0, %c0_i32 : i32, i32
  }
  func.func @transform_2(%arg0: i32) -> (i32, i32) {
    %c0_i32 = arith.constant 0 : i32
    %c0_i32_0 = arith.constant 0 : i32
    %c0_i32_1 = arith.constant 0 : i32
    return %c0_i32, %c0_i32_0 : i32, i32
  }
  func.func @transform_3(%arg0: i32) -> (i32, i32) {
    %c0_i32 = arith.constant 0 : i32
    %c0_i32_0 = arith.constant 0 : i32
    %c0_i32_1 = arith.constant 0 : i32
    return %c0_i32, %c0_i32_0 : i32, i32
  }
  func.func @transform_4(%arg0: i32) -> (i32, i32) {
    %c0_i32 = arith.constant 0 : i32
    %c0_i32_0 = arith.constant 0 : i32
    %c0_i32_1 = arith.constant 0 : i32
    return %c0_i32, %c0_i32_0 : i32, i32
  }
  func.func @transform_5(%arg0: i32) -> (i32, i32) {
    %c0_i32 = arith.constant 0 : i32
    %c0_i32_0 = arith.constant 0 : i32
    %c0_i32_1 = arith.constant 0 : i32
    return %c0_i32, %c0_i32_0 : i32, i32
  }
  func.func @transform_6(%arg0: i32) -> (i32, i32) {
    %c0_i32 = arith.constant 0 : i32
    %c0_i32_0 = arith.constant 0 : i32
    %c0_i32_1 = arith.constant 0 : i32
    return %c0_i32, %c0_i32_0 : i32, i32
  }
  func.func @transform_7(%arg0: i32) -> (i32, i32) {
    %c0_i32 = arith.constant 0 : i32
    %c0_i32_0 = arith.constant 0 : i32
    %c0_i32_1 = arith.constant 0 : i32
    return %c0_i32, %c0_i32_0 : i32, i32
  }
  func.func @transform_8(%arg0: i32) -> (i32, i32) {
    %c0_i32 = arith.constant 0 : i32
    %c0_i32_0 = arith.constant 0 : i32
    %c0_i32_1 = arith.constant 0 : i32
    return %c0_i32, %c0_i32_0 : i32, i32
  }
  func.func @transform_9(%arg0: i32) -> (i32, i32) {
    %c0_i32 = arith.constant 0 : i32
    %c0_i32_0 = arith.constant 0 : i32
    return %arg0, %c0_i32 : i32, i32
  }
}

</mosaic_0001>

<llo_original>
// kernel: tpu_custom_call.1
$region0: #{tpu_custom_call.1}
  #allocation0 [shape = 'u32[]', space=smem, size = 0x4, offset = 0x4, fixed_abs, tag = 'smem constant byte address 0x4 - core index']
  #allocation1 [shape = 'u32[144,128]{1,0:T(1,128)}', space=vmem, size = 0x12000, scoped, tag = 'internal scratch']
  %s0 = inlined_call_operand.vmem [shape: f32[16,16], index: 0, kind: input, shape index: {}]
  %s1 = inlined_call_operand.vmem [shape: f32[16,4], index: 1, kind: input, shape index: {}]
  %s2 = inlined_call_operand.hbm [shape: f32[16,512], index: 2, kind: input, shape index: {}]
  %s3 = inlined_call_operand.hbm [shape: f32[1,512], index: 3, kind: input, shape index: {}]
  %s4 = inlined_call_operand.hbm [shape: f32[512,384], index: 4, kind: input, shape index: {}]
  %s5 = inlined_call_operand.vmem [shape: f32[4,384], index: 5, kind: input, shape index: {}]
  %s6 = inlined_call_operand.vmem [shape: f32[1,384], index: 6, kind: input, shape index: {}]
  %s7 = inlined_call_operand.hbm [shape: f32[384,128], index: 7, kind: input, shape index: {}]
  %s8 = inlined_call_operand.vmem [shape: f32[1,128], index: 8, kind: input, shape index: {}]
  %s9 = inlined_call_operand.hbm [shape: f32[16,128], index: 9, kind: output, shape index: {}]
  %s10 = sld [smem:[#allocation0]]
  $region62: #{tpu_custom_call.1} parent=0
    _
  %s12 = ssub.s32 1, %s10
  %s13 = scalar_select 0, %s12, %s10
  $region1: #{tpu_custom_call.1} parent=0
    #allocation2 [shape = 'u8[32768]{0}', space=vmem, size = 0x8000, scoped, tag = 'input window, operand 2, single buffered']
    #allocation3 [shape = 's32[1]{0}', space=sflag, size = 0x4, scoped, tag = 'scoped memory for tpu_custom_call.1']
    #allocation4 [shape = 's32[1]{0}', space=sflag, size = 0x4, scoped, tag = 'scoped memory for tpu_custom_call.1']
    #allocation5 [shape = 'u8[2048]{0}', space=vmem, size = 0x800, scoped, tag = 'input window, operand 3, single buffered']
    #allocation6 [shape = 's32[1]{0}', space=sflag, size = 0x4, scoped, tag = 'scoped memory for tpu_custom_call.1']
    #allocation7 [shape = 'u8[786432]{0}', space=vmem, size = 0xc0000, scoped, tag = 'input window, operand 4, single buffered']
    #allocation8 [shape = 'u8[196608]{0}', space=vmem, size = 0x30000, scoped, tag = 'input window, operand 7, single buffered']
    #allocation9 [shape = 's32[1]{0}', space=sflag, size = 0x4, scoped, tag = 'scoped memory for tpu_custom_call.1']
    #allocation10 [shape = 'u8[8192]{0}', space=vmem, size = 0x2000, scoped, tag = 'output window, operand 0, single buffered']
    %14 = vsyncpa [#allocation3], 0
    %15 = vsyncpa [#allocation6], 0
    %16 = vsyncpa [#allocation9], 0
    %17 = vsyncpa [#allocation4], 0
    // Predicated region
    $region2: #{tpu_custom_call.1} parent=1 // pred_check
      _
    $region3: #{tpu_custom_call.1} parent=1 // pred_check_branch
      %19 = sbr.rel (0) target = $region5
    $region4: #{tpu_custom_call.1} parent=1 // pred_region
      _
    $region5: #{tpu_custom_call.1} parent=1 // pred_fallthru
      _
    // Predicated region
    $region6: #{tpu_custom_call.1} parent=1 // pred_check
      _
    $region7: #{tpu_custom_call.1} parent=1 // pred_check_branch
      %21 = sbr.rel (0) target = $region9
    $region8: #{tpu_custom_call.1} parent=1 // pred_region
      _
    $region9: #{tpu_custom_call.1} parent=1 // pred_fallthru
      _
    // Predicated region
    $region10: #{tpu_custom_call.1} parent=1 // pred_check
      _
    $region11: #{tpu_custom_call.1} parent=1 // pred_check_branch
      %23 = sbr.rel (0) target = $region13
    $region12: #{tpu_custom_call.1} parent=1 // pred_region
      %s25 = ssub.s32 1024, 1024
      %26 = vsyncadd [#allocation3], %s25
      %s27 = sshll.u32 [#allocation2], 4
      %s28 = int_to_ptr.vmem [resolvable:$true] %s27
      %33 = dma.hbm_to_vmem [thread:$0]  %s2, 1024, %s28, [#allocation3], 512, 512, 32
    $region13: #{tpu_custom_call.1} parent=1 // pred_fallthru
      _
    // Predicated region
    $region14: #{tpu_custom_call.1} parent=1 // pred_check
      _
    $region15: #{tpu_custom_call.1} parent=1 // pred_check_branch
      %35 = sbr.rel (0) target = $region17
    $region16: #{tpu_custom_call.1} parent=1 // pred_region
      %s37 = ssub.s32 64, 64
      %38 = vsyncadd [#allocation6], %s37
      %s40 = sshll.u32 [#allocation5], 4
      %s41 = int_to_ptr.vmem [resolvable:$true] %s40
      %43 = dma.hbm_to_vmem [thread:$0]  %s3, 64, %s41, [#allocation6]
    $region17: #{tpu_custom_call.1} parent=1 // pred_fallthru
      _
    // Predicated region
    $region18: #{tpu_custom_call.1} parent=1 // pred_check
      _
    $region19: #{tpu_custom_call.1} parent=1 // pred_check_branch
      %45 = sbr.rel (0) target = $region21
    $region20: #{tpu_custom_call.1} parent=1 // pred_region
      %s47 = ssub.s32 24576, 24576
      %48 = vsyncadd [#allocation6], %s47
      %s49 = sshll.u32 [#allocation7], 4
      %s50 = int_to_ptr.vmem [resolvable:$true] %s49
      %55 = dma.hbm_to_vmem [thread:$0]  %s4, 24576, %s50, [#allocation6], 384, 384, 24
    $region21: #{tpu_custom_call.1} parent=1 // pred_fallthru
      _
    // Predicated region
    $region22: #{tpu_custom_call.1} parent=1 // pred_check
      _
    $region23: #{tpu_custom_call.1} parent=1 // pred_check_branch
      %57 = sbr.rel (0) target = $region25
    $region24: #{tpu_custom_call.1} parent=1 // pred_region
      _
    $region25: #{tpu_custom_call.1} parent=1 // pred_fallthru
      _
    // Predicated region
    $region26: #{tpu_custom_call.1} parent=1 // pred_check
      _
    $region27: #{tpu_custom_call.1} parent=1 // pred_check_branch
      %59 = sbr.rel (0) target = $region29
    $region28: #{tpu_custom_call.1} parent=1 // pred_region
      _
    $region29: #{tpu_custom_call.1} parent=1 // pred_fallthru
      _
    // Predicated region
    $region30: #{tpu_custom_call.1} parent=1 // pred_check
      _
    $region31: #{tpu_custom_call.1} parent=1 // pred_check_branch
      %61 = sbr.rel (0) target = $region33
    $region32: #{tpu_custom_call.1} parent=1 // pred_region
      %s63 = ssub.s32 6144, 6144
      %64 = vsyncadd [#allocation9], %s63
      %s65 = sshll.u32 [#allocation8], 4
      %s66 = int_to_ptr.vmem [resolvable:$true] %s65
      %71 = dma.hbm_to_vmem [thread:$0]  %s7, 6144, %s66, [#allocation9], 128, 128, 8
    $region33: #{tpu_custom_call.1} parent=1 // pred_fallthru
      _
    // Predicated region
    $region34: #{tpu_custom_call.1} parent=1 // pred_check
      _
    $region35: #{tpu_custom_call.1} parent=1 // pred_check_branch
      %73 = sbr.rel (0) target = $region37
    $region36: #{tpu_custom_call.1} parent=1 // pred_region
      _
    $region37: #{tpu_custom_call.1} parent=1 // pred_fallthru
      _
    // Predicated region
    $region38: #{tpu_custom_call.1} parent=1 // pred_check
      _
    $region39: #{tpu_custom_call.1} parent=1 // pred_check_branch
      %75 = sbr.rel (0) target = $region41
    $region40: #{tpu_custom_call.1} parent=1 // pred_region
      %76 = dma.done [#allocation3], 1024
    $region41: #{tpu_custom_call.1} parent=1 // pred_fallthru
      _
    // Predicated region
    $region42: #{tpu_custom_call.1} parent=1 // pred_check
      _
    $region43: #{tpu_custom_call.1} parent=1 // pred_check_branch
      %78 = sbr.rel (0) target = $region45
    $region44: #{tpu_custom_call.1} parent=1 // pred_region
      %79 = dma.done [#allocation6], 64
    $region45: #{tpu_custom_call.1} parent=1 // pred_fallthru
      _
    // Predicated region
    $region46: #{tpu_custom_call.1} parent=1 // pred_check
      _
    $region47: #{tpu_custom_call.1} parent=1 // pred_check_branch
      %81 = sbr.rel (0) target = $region49
    $region48: #{tpu_custom_call.1} parent=1 // pred_region
      %82 = dma.done [#allocation6], 24576
    $region49: #{tpu_custom_call.1} parent=1 // pred_fallthru
      _
    // Predicated region
    $region50: #{tpu_custom_call.1} parent=1 // pred_check
      _
    $region51: #{tpu_custom_call.1} parent=1 // pred_check_branch
      %84 = sbr.rel (0) target = $region53
    $region52: #{tpu_custom_call.1} parent=1 // pred_region
      %85 = dma.done [#allocation9], 6144
    $region53: #{tpu_custom_call.1} parent=1 // pred_fallthru
      _
    %v86 = vld [vmem:[%s0] sm:$0xff]
    %v87 = vld [vmem:[%s0 + $0x8] sm:$0xff]
    %v88 = vld [vmem:[#allocation2] sm:$0xff]
    %v89 = vld [vmem:[#allocation2 + $0x8] sm:$0xff]
    %v90 = vld [vmem:[#allocation2 + $0x10] sm:$0xff]
    %v91 = vld [vmem:[#allocation2 + $0x18] sm:$0xff]
    %v92 = vld [vmem:[#allocation2 + $0x20] sm:$0xff]
    %v93 = vld [vmem:[#allocation2 + $0x28] sm:$0xff]
    %v94 = vld [vmem:[#allocation2 + $0x30] sm:$0xff]
    %v95 = vld [vmem:[#allocation2 + $0x38] sm:$0xff]
    %v96 = vld [vmem:[#allocation5] sm:$0xf]
    %v98 = vlaneseq
    %v99 = vshrl.u32 %v98, 7
    %v100 = vsub.s32 0, %v99
    %v101 = vrot.slane %v96, %v100
    %v102 = vlaneseq
    %v103 = vshrl.u32 %v102, 7
    %v104 = vsub.s32 1, %v103
    %v105 = vrot.slane %v96, %v104
    %v106 = vlaneseq
    %v107 = vshrl.u32 %v106, 7
    %v108 = vsub.s32 2, %v107
    %v109 = vrot.slane %v96, %v108
    %v110 = vlaneseq
    %v111 = vshrl.u32 %v110, 7
    %v112 = vsub.s32 3, %v111
    %v113 = vrot.slane %v96, %v112
    %vm118 = vcmask 130048
    %v120 = vsel %vm118, %v86, 0
    %v123 = vsel %vm118, %v87, 0
    %125 = vmatprep.subr.mxu0 %v89
    %126 = vmatpush1.msra.mxu0 %v88
    %127 = vmatprep.subr.mxu0 %v93
    %128 = vmatpush1.msra.mxu0 %v92
    %129 = vmatprep.subr.mxu0 0.0
    %130 = vmatpush1.msra.mxu0 0.0
    %131 = vmatprep.subr.mxu0 0.0
    %132 = vmatpush1.msra.mxu0 0.0
    %133 = vmatprep.subr.mxu0 0.0
    %134 = vmatpush1.msra.mxu0 0.0
    %135 = vmatprep.subr.mxu0 0.0
    %136 = vmatpush1.msra.mxu0 0.0
    %137 = vmatprep.subr.mxu0 0.0
    %138 = vmatpush1.msra.mxu0 0.0
    %139 = vmatprep.subr.mxu0 0.0
    %140 = vmatpush1.msra.mxu0 0.0
    %141 = vmatprep.subr.mxu0 0.0
    %142 = vmatpush1.msra.mxu0 0.0
    %143 = vmatprep.subr.mxu0 0.0
    %144 = vmatpush1.msra.mxu0 0.0
    %145 = vmatprep.subr.mxu0 0.0
    %146 = vmatpush1.msra.mxu0 0.0
    %147 = vmatprep.subr.mxu0 0.0
    %148 = vmatpush1.msra.mxu0 0.0
    %149 = vmatprep.subr.mxu0 0.0
    %150 = vmatpush1.msra.mxu0 0.0
    %151 = vmatprep.subr.mxu0 0.0
    %152 = vmatpush1.msra.mxu0 0.0
    %153 = vmatprep.subr.mxu0 0.0
    %154 = vmatpush1.msra.mxu0 0.0
    %155 = vmatprep.subr.mxu0 0.0
    %156 = vmatpush1.msra.mxu0 0.0
    %157 = vmatprep.subr.mxu0 0.0
    %158 = vmatpush1.msra.mxu0 0.0
    %159 = vmatprep.subr.mxu0 0.0
    %160 = vmatpush1.msra.mxu0 0.0
    %161 = vmatprep.subr.mxu0 0.0
    %162 = vmatpush1.msra.mxu0 0.0
    %163 = vmatprep.subr.mxu0 0.0
    %164 = vmatpush1.msra.mxu0 0.0
    %165 = vmatprep.subr.mxu0 0.0
    %166 = vmatpush1.msra.mxu0 0.0
    %167 = vmatprep.subr.mxu0 0.0
    %168 = vmatpush1.msra.mxu0 0.0
    %169 = vmatprep.subr.mxu0 0.0
    %170 = vmatpush1.msra.mxu0 0.0
    %171 = vmatprep.subr.mxu0 0.0
    %172 = vmatpush1.msra.mxu0 0.0
    %173 = vmatprep.subr.mxu0 0.0
    %174 = vmatpush1.msra.mxu0 0.0
    %175 = vmatprep.subr.mxu0 0.0
    %176 = vmatpush1.msra.mxu0 0.0
    %177 = vmatprep.subr.mxu0 0.0
    %178 = vmatpush1.msra.mxu0 0.0
    %179 = vmatprep.subr.mxu0 0.0
    %180 = vmatpush1.msra.mxu0 0.0
    %181 = vmatprep.subr.mxu0 0.0
    %182 = vmatpush1.msra.mxu0 0.0
    %183 = vmatprep.subr.mxu0 0.0
    %184 = vmatpush1.msra.mxu0 0.0
    %185 = vmatprep.subr.mxu0 0.0
    %186 = vmatpush1.msra.mxu0 0.0
    %187 = vmatprep.subr.mxu0 0.0
    %188 = vmatpush1.msra.mxu0 0.0
    %189 = vmatprep.mubr.f32.mxu0 0.0
    %190 = vmatmul.mubr.f32.gmra.mrb[0].mxu0 %v120
    %v191 = vpop.f32.mrb[0].mxu0
    %v192 = vadd.f32 %v101, %v191
    %v193 = vpop.f32.mrb[0].mxu0
    %v194 = vadd.f32 %v105, %v193
    %195 = vmatprep.mubr.f32.mxu0 0.0
    %196 = vmatmul.mubr.f32.gmra.mrb[0].mxu0 %v123
    %v197 = vpop.f32.mrb[0].mxu0
    %v198 = vadd.f32 %v101, %v197
    %v199 = vpop.f32.mrb[0].mxu0
    %v200 = vadd.f32 %v105, %v199
    %201 = vdwg.mxu0
    %202 = vmatprep.subr.mxu0 %v91
    %203 = vmatpush1.msra.mxu0 %v90
    %204 = vmatprep.subr.mxu0 %v95
    %205 = vmatpush1.msra.mxu0 %v94
    %206 = vmatprep.subr.mxu0 0.0
    %207 = vmatpush1.msra.mxu0 0.0
    %208 = vmatprep.subr.mxu0 0.0
    %209 = vmatpush1.msra.mxu0 0.0
    %210 = vmatprep.subr.mxu0 0.0
    %211 = vmatpush1.msra.mxu0 0.0
    %212 = vmatprep.subr.mxu0 0.0
    %213 = vmatpush1.msra.mxu0 0.0
    %214 = vmatprep.subr.mxu0 0.0
    %215 = vmatpush1.msra.mxu0 0.0
    %216 = vmatprep.subr.mxu0 0.0
    %217 = vmatpush1.msra.mxu0 0.0
    %218 = vmatprep.subr.mxu0 0.0
    %219 = vmatpush1.msra.mxu0 0.0
    %220 = vmatprep.subr.mxu0 0.0
    %221 = vmatpush1.msra.mxu0 0.0
    %222 = vmatprep.subr.mxu0 0.0
    %223 = vmatpush1.msra.mxu0 0.0
    %224 = vmatprep.subr.mxu0 0.0
    %225 = vmatpush1.msra.mxu0 0.0
    %226 = vmatprep.subr.mxu0 0.0
    %227 = vmatpush1.msra.mxu0 0.0
    %228 = vmatprep.subr.mxu0 0.0
    %229 = vmatpush1.msra.mxu0 0.0
    %230 = vmatprep.subr.mxu0 0.0
    %231 = vmatpush1.msra.mxu0 0.0
    %232 = vmatprep.subr.mxu0 0.0
    %233 = vmatpush1.msra.mxu0 0.0
    %234 = vmatprep.subr.mxu0 0.0
    %235 = vmatpush1.msra.mxu0 0.0
    %236 = vmatprep.subr.mxu0 0.0
    %237 = vmatpush1.msra.mxu0 0.0
    %238 = vmatprep.subr.mxu0 0.0
    %239 = vmatpush1.msra.mxu0 0.0
    %240 = vmatprep.subr.mxu0 0.0
    %241 = vmatpush1.msra.mxu0 0.0
    %242 = vmatprep.subr.mxu0 0.0
    %243 = vmatpush1.msra.mxu0 0.0
    %244 = vmatprep.subr.mxu0 0.0
    %245 = vmatpush1.msra.mxu0 0.0
    %246 = vmatprep.subr.mxu0 0.0
    %247 = vmatpush1.msra.mxu0 0.0
    %248 = vmatprep.subr.mxu0 0.0
    %249 = vmatpush1.msra.mxu0 0.0
    %250 = vmatprep.subr.mxu0 0.0
    %251 = vmatpush1.msra.mxu0 0.0
    %252 = vmatprep.subr.mxu0 0.0
    %253 = vmatpush1.msra.mxu0 0.0
    %254 = vmatprep.subr.mxu0 0.0
    %255 = vmatpush1.msra.mxu0 0.0
    %256 = vmatprep.subr.mxu0 0.0
    %257 = vmatpush1.msra.mxu0 0.0
    %258 = vmatprep.subr.mxu0 0.0
    %259 = vmatpush1.msra.mxu0 0.0
    %260 = vmatprep.subr.mxu0 0.0
    %261 = vmatpush1.msra.mxu0 0.0
    %262 = vmatprep.subr.mxu0 0.0
    %263 = vmatpush1.msra.mxu0 0.0
    %264 = vmatprep.subr.mxu0 0.0
    %265 = vmatpush1.msra.mxu0 0.0
    %266 = vmatprep.mubr.f32.mxu0 0.0
    %267 = vmatmul.mubr.f32.gmra.mrb[0].mxu0 %v120
    %v268 = vpop.f32.mrb[0].mxu0
    %v269 = vadd.f32 %v109, %v268
    %v270 = vpop.f32.mrb[0].mxu0
    %v271 = vadd.f32 %v113, %v270
    %272 = vmatprep.mubr.f32.mxu0 0.0
    %273 = vmatmul.mubr.f32.gmra.mrb[0].mxu0 %v123
    %v274 = vpop.f32.mrb[0].mxu0
    %v275 = vadd.f32 %v109, %v274
    %v276 = vpop.f32.mrb[0].mxu0
    %v277 = vadd.f32 %v113, %v276
    %278 = vdwg.mxu0
    %v279 = vmax.f32 %v192, 0.0
    %v280 = vmax.f32 %v194, 0.0
    %v281 = vmax.f32 %v269, 0.0
    %v282 = vmax.f32 %v271, 0.0
    %v283 = vmax.f32 %v198, 0.0
    %v284 = vmax.f32 %v200, 0.0
    %v285 = vmax.f32 %v275, 0.0
    %v286 = vmax.f32 %v277, 0.0
    %v287 = vld [vmem:[#allocation7] sm:$0xff]
    %v288 = vld [vmem:[#allocation7 + $0x8] sm:$0xff]
    %v289 = vld [vmem:[#allocation7 + $0x10] sm:$0xff]
    %v290 = vld [vmem:[#allocation7 + $0x18] sm:$0xff]
    %v291 = vld [vmem:[#allocation7 + $0x20] sm:$0xff]
    %v292 = vld [vmem:[#allocation7 + $0x28] sm:$0xff]
    %v293 = vld [vmem:[#allocation7 + $0x30] sm:$0xff]
    %v294 = vld [vmem:[#allocation7 + $0x38] sm:$0xff]
    %v295 = vld [vmem:[#allocation7 + $0x40] sm:$0xff]
    %v296 = vld [vmem:[#allocation7 + $0x48] sm:$0xff]
    %v297 = vld [vmem:[#allocation7 + $0x50] sm:$0xff]
    %v298 = vld [vmem:[#allocation7 + $0x58] sm:$0xff]
    %v299 = vld [vmem:[#allocation7 + $0x60] sm:$0xff]
    %v300 = vld [vmem:[#allocation7 + $0x68] sm:$0xff]
    %v301 = vld [vmem:[#allocation7 + $0x70] sm:$0xff]
    %v302 = vld [vmem:[#allocation7 + $0x78] sm:$0xff]
    %v303 = vld [vmem:[#allocation7 + $0x80] sm:$0xff]
    %v304 = vld [vmem:[#allocation7 + $0x88] sm:$0xff]
    %v305 = vld [vmem:[#allocation7 + $0x90] sm:$0xff]
    %v306 = vld [vmem:[#allocation7 + $0x98] sm:$0xff]
    %v307 = vld [vmem:[#allocation7 + $0xa0] sm:$0xff]
    %v308 = vld [vmem:[#allocation7 + $0xa8] sm:$0xff]
    %v309 = vld [vmem:[#allocation7 + $0xb0] sm:$0xff]
    %v310 = vld [vmem:[#allocation7 + $0xb8] sm:$0xff]
    %v311 = vld [vmem:[#allocation7 + $0xc0] sm:$0xff]
    %v312 = vld [vmem:[#allocation7 + $0xc8] sm:$0xff]
    %v313 = vld [vmem:[#allocation7 + $0xd0] sm:$0xff]
    %v314 = vld [vmem:[#allocation7 + $0xd8] sm:$0xff]
    %v315 = vld [vmem:[#allocation7 + $0xe0] sm:$0xff]
    %v316 = vld [vmem:[#allocation7 + $0xe8] sm:$0xff]
    %v317 = vld [vmem:[#allocation7 + $0xf0] sm:$0xff]
    %v318 = vld [vmem:[#allocation7 + $0xf8] sm:$0xff]
    %v319 = vld [vmem:[#allocation7 + $0x100] sm:$0xff]
    %v320 = vld [vmem:[#allocation7 + $0x108] sm:$0xff]
    %v321 = vld [vmem:[#allocation7 + $0x110] sm:$0xff]
    %v322 = vld [vmem:[#allocation7 + $0x118] sm:$0xff]
    %v323 = vld [vmem:[#allocation7 + $0x120] sm:$0xff]
    %v324 = vld [vmem:[#allocation7 + $0x128] sm:$0xff]
    %v325 = vld [vmem:[#allocation7 + $0x130] sm:$0xff]
    %v326 = vld [vmem:[#allocation7 + $0x138] sm:$0xff]
    %v327 = vld [vmem:[#allocation7 + $0x140] sm:$0xff]
    %v328 = vld [vmem:[#allocation7 + $0x148] sm:$0xff]
    %v329 = vld [vmem:[#allocation7 + $0x150] sm:$0xff]
    %v330 = vld [vmem:[#allocation7 + $0x158] sm:$0xff]
    %v331 = vld [vmem:[#allocation7 + $0x160] sm:$0xff]
    %v332 = vld [vmem:[#allocation7 + $0x168] sm:$0xff]
    %v333 = vld [vmem:[#allocation7 + $0x170] sm:$0xff]
    %v334 = vld [vmem:[#allocation7 + $0x178] sm:$0xff]
    %v335 = vld [vmem:[#allocation7 + $0x180] sm:$0xff]
    %v336 = vld [vmem:[#allocation7 + $0x188] sm:$0xff]
    %v337 = vld [vmem:[#allocation7 + $0x190] sm:$0xff]
    %v338 = vld [vmem:[#allocation7 + $0x198] sm:$0xff]
    %v339 = vld [vmem:[#allocation7 + $0x1a0] sm:$0xff]
    %v340 = vld [vmem:[#allocation7 + $0x1a8] sm:$0xff]
    %v341 = vld [vmem:[#allocation7 + $0x1b0] sm:$0xff]
    %v342 = vld [vmem:[#allocation7 + $0x1b8] sm:$0xff]
    %v343 = vld [vmem:[#allocation7 + $0x1c0] sm:$0xff]
    %v344 = vld [vmem:[#allocation7 + $0x1c8] sm:$0xff]
    %v345 = vld [vmem:[#allocation7 + $0x1d0] sm:$0xff]
    %v346 = vld [vmem:[#allocation7 + $0x1d8] sm:$0xff]
    %v347 = vld [vmem:[#allocation7 + $0x1e0] sm:$0xff]
    %v348 = vld [vmem:[#allocation7 + $0x1e8] sm:$0xff]
    %v349 = vld [vmem:[#allocation7 + $0x1f0] sm:$0xff]
    %v350 = vld [vmem:[#allocation7 + $0x1f8] sm:$0xff]
    %v351 = vld [vmem:[#allocation7 + $0x200] sm:$0xff]
    %v352 = vld [vmem:[#allocation7 + $0x208] sm:$0xff]
    %v353 = vld [vmem:[#allocation7 + $0x210] sm:$0xff]
    %v354 = vld [vmem:[#allocation7 + $0x218] sm:$0xff]
    %v355 = vld [vmem:[#allocation7 + $0x220] sm:$0xff]
    %v356 = vld [vmem:[#allocation7 + $0x228] sm:$0xff]
    %v357 = vld [vmem:[#allocation7 + $0x230] sm:$0xff]
    %v358 = vld [vmem:[#allocation7 + $0x238] sm:$0xff]
    %v359 = vld [vmem:[#allocation7 + $0x240] sm:$0xff]
    %v360 = vld [vmem:[#allocation7 + $0x248] sm:$0xff]
    %v361 = vld [vmem:[#allocation7 + $0x250] sm:$0xff]
    %v362 = vld [vmem:[#allocation7 + $0x258] sm:$0xff]
    %v363 = vld [vmem:[#allocation7 + $0x260] sm:$0xff]
    %v364 = vld [vmem:[#allocation7 + $0x268] sm:$0xff]
    %v365 = vld [vmem:[#allocation7 + $0x270] sm:$0xff]
    %v366 = vld [vmem:[#allocation7 + $0x278] sm:$0xff]
    %v367 = vld [vmem:[#allocation7 + $0x280] sm:$0xff]
    %v368 = vld [vmem:[#allocation7 + $0x288] sm:$0xff]
    %v369 = vld [vmem:[#allocation7 + $0x290] sm:$0xff]
    %v370 = vld [vmem:[#allocation7 + $0x298] sm:$0xff]
    %v371 = vld [vmem:[#allocation7 + $0x2a0] sm:$0xff]
    %v372 = vld [vmem:[#allocation7 + $0x2a8] sm:$0xff]
    %v373 = vld [vmem:[#allocation7 + $0x2b0] sm:$0xff]
    %v374 = vld [vmem:[#allocation7 + $0x2b8] sm:$0xff]
    %v375 = vld [vmem:[#allocation7 + $0x2c0] sm:$0xff]
    %v376 = vld [vmem:[#allocation7 + $0x2c8] sm:$0xff]
    %v377 = vld [vmem:[#allocation7 + $0x2d0] sm:$0xff]
    %v378 = vld [vmem:[#allocation7 + $0x2d8] sm:$0xff]
    %v379 = vld [vmem:[#allocation7 + $0x2e0] sm:$0xff]
    %v380 = vld [vmem:[#allocation7 + $0x2e8] sm:$0xff]
    %v381 = vld [vmem:[#allocation7 + $0x2f0] sm:$0xff]
    %v382 = vld [vmem:[#allocation7 + $0x2f8] sm:$0xff]
    %v383 = vld [vmem:[#allocation7 + $0x300] sm:$0xff]
    %v384 = vld [vmem:[#allocation7 + $0x308] sm:$0xff]
    %v385 = vld [vmem:[#allocation7 + $0x310] sm:$0xff]
    %v386 = vld [vmem:[#allocation7 + $0x318] sm:$0xff]
    %v387 = vld [vmem:[#allocation7 + $0x320] sm:$0xff]
    %v388 = vld [vmem:[#allocation7 + $0x328] sm:$0xff]
    %v389 = vld [vmem:[#allocation7 + $0x330] sm:$0xff]
    %v390 = vld [vmem:[#allocation7 + $0x338] sm:$0xff]
    %v391 = vld [vmem:[#allocation7 + $0x340] sm:$0xff]
    %v392 = vld [vmem:[#allocation7 + $0x348] sm:$0xff]
    %v393 = vld [vmem:[#allocation7 + $0x350] sm:$0xff]
    %v394 = vld [vmem:[#allocation7 + $0x358] sm:$0xff]
    %v395 = vld [vmem:[#allocation7 + $0x360] sm:$0xff]
    %v396 = vld [vmem:[#allocation7 + $0x368] sm:$0xff]
    %v397 = vld [vmem:[#allocation7 + $0x370] sm:$0xff]
    %v398 = vld [vmem:[#allocation7 + $0x378] sm:$0xff]
    %v399 = vld [vmem:[#allocation7 + $0x380] sm:$0xff]
    %v400 = vld [vmem:[#allocation7 + $0x388] sm:$0xff]
    %v401 = vld [vmem:[#allocation7 + $0x390] sm:$0xff]
    %v402 = vld [vmem:[#allocation7 + $0x398] sm:$0xff]
    %v403 = vld [vmem:[#allocation7 + $0x3a0] sm:$0xff]
    %v404 = vld [vmem:[#allocation7 + $0x3a8] sm:$0xff]
    %v405 = vld [vmem:[#allocation7 + $0x3b0] sm:$0xff]
    %v406 = vld [vmem:[#allocation7 + $0x3b8] sm:$0xff]
    %v407 = vld [vmem:[#allocation7 + $0x3c0] sm:$0xff]
    %v408 = vld [vmem:[#allocation7 + $0x3c8] sm:$0xff]
    %v409 = vld [vmem:[#allocation7 + $0x3d0] sm:$0xff]
    %v410 = vld [vmem:[#allocation7 + $0x3d8] sm:$0xff]
    %v411 = vld [vmem:[#allocation7 + $0x3e0] sm:$0xff]
    %v412 = vld [vmem:[#allocation7 + $0x3e8] sm:$0xff]
    %v413 = vld [vmem:[#allocation7 + $0x3f0] sm:$0xff]
    %v414 = vld [vmem:[#allocation7 + $0x3f8] sm:$0xff]
    %v415 = vld [vmem:[#allocation7 + $0x400] sm:$0xff]
    %v416 = vld [vmem:[#allocation7 + $0x408] sm:$0xff]
    %v417 = vld [vmem:[#allocation7 + $0x410] sm:$0xff]
    %v418 = vld [vmem:[#allocation7 + $0x418] sm:$0xff]
    %v419 = vld [vmem:[#allocation7 + $0x420] sm:$0xff]
    %v420 = vld [vmem:[#allocation7 + $0x428] sm:$0xff]
    %v421 = vld [vmem:[#allocation7 + $0x430] sm:$0xff]
    %v422 = vld [vmem:[#allocation7 + $0x438] sm:$0xff]
    %v423 = vld [vmem:[#allocation7 + $0x440] sm:$0xff]
    %v424 = vld [vmem:[#allocation7 + $0x448] sm:$0xff]
    %v425 = vld [vmem:[#allocation7 + $0x450] sm:$0xff]
    %v426 = vld [vmem:[#allocation7 + $0x458] sm:$0xff]
    %v427 = vld [vmem:[#allocation7 + $0x460] sm:$0xff]
    %v428 = vld [vmem:[#allocation7 + $0x468] sm:$0xff]
    %v429 = vld [vmem:[#allocation7 + $0x470] sm:$0xff]
    %v430 = vld [vmem:[#allocation7 + $0x478] sm:$0xff]
    %v431 = vld [vmem:[#allocation7 + $0x480] sm:$0xff]
    %v432 = vld [vmem:[#allocation7 + $0x488] sm:$0xff]
    %v433 = vld [vmem:[#allocation7 + $0x490] sm:$0xff]
    %v434 = vld [vmem:[#allocation7 + $0x498] sm:$0xff]
    %v435 = vld [vmem:[#allocation7 + $0x4a0] sm:$0xff]
    %v436 = vld [vmem:[#allocation7 + $0x4a8] sm:$0xff]
    %v437 = vld [vmem:[#allocation7 + $0x4b0] sm:$0xff]
    %v438 = vld [vmem:[#allocation7 + $0x4b8] sm:$0xff]
    %v439 = vld [vmem:[#allocation7 + $0x4c0] sm:$0xff]
    %v440 = vld [vmem:[#allocation7 + $0x4c8] sm:$0xff]
    %v441 = vld [vmem:[#allocation7 + $0x4d0] sm:$0xff]
    %v442 = vld [vmem:[#allocation7 + $0x4d8] sm:$0xff]
    %v443 = vld [vmem:[#allocation7 + $0x4e0] sm:$0xff]
    %v444 = vld [vmem:[#allocation7 + $0x4e8] sm:$0xff]
    %v445 = vld [vmem:[#allocation7 + $0x4f0] sm:$0xff]
    %v446 = vld [vmem:[#allocation7 + $0x4f8] sm:$0xff]
    %v447 = vld [vmem:[#allocation7 + $0x500] sm:$0xff]
    %v448 = vld [vmem:[#allocation7 + $0x508] sm:$0xff]
    %v449 = vld [vmem:[#allocation7 + $0x510] sm:$0xff]
    %v450 = vld [vmem:[#allocation7 + $0x518] sm:$0xff]
    %v451 = vld [vmem:[#allocation7 + $0x520] sm:$0xff]
    %v452 = vld [vmem:[#allocation7 + $0x528] sm:$0xff]
    %v453 = vld [vmem:[#allocation7 + $0x530] sm:$0xff]
    %v454 = vld [vmem:[#allocation7 + $0x538] sm:$0xff]
    %v455 = vld [vmem:[#allocation7 + $0x540] sm:$0xff]
    %v456 = vld [vmem:[#allocation7 + $0x548] sm:$0xff]
    %v457 = vld [vmem:[#allocation7 + $0x550] sm:$0xff]
    %v458 = vld [vmem:[#allocation7 + $0x558] sm:$0xff]
    %v459 = vld [vmem:[#allocation7 + $0x560] sm:$0xff]
    %v460 = vld [vmem:[#allocation7 + $0x568] sm:$0xff]
    %v461 = vld [vmem:[#allocation7 + $0x570] sm:$0xff]
    %v462 = vld [vmem:[#allocation7 + $0x578] sm:$0xff]
    %v463 = vld [vmem:[#allocation7 + $0x580] sm:$0xff]
    %v464 = vld [vmem:[#allocation7 + $0x588] sm:$0xff]
    %v465 = vld [vmem:[#allocation7 + $0x590] sm:$0xff]
    %v466 = vld [vmem:[#allocation7 + $0x598] sm:$0xff]
    %v467 = vld [vmem:[#allocation7 + $0x5a0] sm:$0xff]
    %v468 = vld [vmem:[#allocation7 + $0x5a8] sm:$0xff]
    %v469 = vld [vmem:[#allocation7 + $0x5b0] sm:$0xff]
    %v470 = vld [vmem:[#allocation7 + $0x5b8] sm:$0xff]
    %v471 = vld [vmem:[#allocation7 + $0x5c0] sm:$0xff]
    %v472 = vld [vmem:[#allocation7 + $0x5c8] sm:$0xff]
    %v473 = vld [vmem:[#allocation7 + $0x5d0] sm:$0xff]
    %v474 = vld [vmem:[#allocation7 + $0x5d8] sm:$0xff]
    %v475 = vld [vmem:[#allocation7 + $0x5e0] sm:$0xff]
    %v476 = vld [vmem:[#allocation7 + $0x5e8] sm:$0xff]
    %v477 = vld [vmem:[#allocation7 + $0x5f0] sm:$0xff]
    %v478 = vld [vmem:[#allocation7 + $0x5f8] sm:$0xff]
    %v479 = vld [vmem:[%s1] sm:$0xff]
    %v480 = vld [vmem:[%s1 + $0x8] sm:$0xff]
    %v481 = vld [vmem:[%s5] sm:$0xff]
    %v482 = vld [vmem:[%s5 + $0x8] sm:$0xf]
    %v485 = vcombine.high %v481, %v481
    %vm486 = vcmask 31744
    %v488 = vsel %vm486, %v479, 0
    %v491 = vsel %vm486, %v480, 0
    %vm493 = vcmask 1043456
    %v494 = vsel %vm493, %v481, 0
    %v496 = vsel %vm493, %v485, 0
    %v498 = vsel %vm493, %v482, 0
    %500 = vmatprep.subr.mxu0 %v496
    %501 = vmatpush1.msra.mxu0 %v494
    %502 = vmatprep.subr.mxu0 0.0
    %503 = vmatpush1.msra.mxu0 0.0
    %504 = vmatprep.subr.mxu0 0.0
    %505 = vmatpush1.msra.mxu0 0.0
    %506 = vmatprep.subr.mxu0 0.0
    %507 = vmatpush1.msra.mxu0 0.0
    %508 = vmatprep.subr.mxu0 0.0
    %509 = vmatpush1.msra.mxu0 0.0
    %510 = vmatprep.subr.mxu0 0.0
    %511 = vmatpush1.msra.mxu0 0.0
    %512 = vmatprep.subr.mxu0 0.0
    %513 = vmatpush1.msra.mxu0 0.0
    %514 = vmatprep.subr.mxu0 0.0
    %515 = vmatpush1.msra.mxu0 0.0
    %516 = vmatprep.subr.mxu0 0.0
    %517 = vmatpush1.msra.mxu0 0.0
    %518 = vmatprep.subr.mxu0 0.0
    %519 = vmatpush1.msra.mxu0 0.0
    %520 = vmatprep.subr.mxu0 0.0
    %521 = vmatpush1.msra.mxu0 0.0
    %522 = vmatprep.subr.mxu0 0.0
    %523 = vmatpush1.msra.mxu0 0.0
    %524 = vmatprep.subr.mxu0 0.0
    %525 = vmatpush1.msra.mxu0 0.0
    %526 = vmatprep.subr.mxu0 0.0
    %527 = vmatpush1.msra.mxu0 0.0
    %528 = vmatprep.subr.mxu0 0.0
    %529 = vmatpush1.msra.mxu0 0.0
    %530 = vmatprep.subr.mxu0 0.0
    %531 = vmatpush1.msra.mxu0 0.0
    %532 = vmatprep.subr.mxu0 0.0
    %533 = vmatpush1.msra.mxu0 0.0
    %534 = vmatprep.subr.mxu0 0.0
    %535 = vmatpush1.msra.mxu0 0.0
    %536 = vmatprep.subr.mxu0 0.0
    %537 = vmatpush1.msra.mxu0 0.0
    %538 = vmatprep.subr.mxu0 0.0
    %539 = vmatpush1.msra.mxu0 0.0
    %540 = vmatprep.subr.mxu0 0.0
    %541 = vmatpush1.msra.mxu0 0.0
    %542 = vmatprep.subr.mxu0 0.0
    %543 = vmatpush1.msra.mxu0 0.0
    %544 = vmatprep.subr.mxu0 0.0
    %545 = vmatpush1.msra.mxu0 0.0
    %546 = vmatprep.subr.mxu0 0.0
    %547 = vmatpush1.msra.mxu0 0.0
    %548 = vmatprep.subr.mxu0 0.0
    %549 = vmatpush1.msra.mxu0 0.0
    %550 = vmatprep.subr.mxu0 0.0
    %551 = vmatpush1.msra.mxu0 0.0
    %552 = vmatprep.subr.mxu0 0.0
    %553 = vmatpush1.msra.mxu0 0.0
    %554 = vmatprep.subr.mxu0 0.0
    %555 = vmatpush1.msra.mxu0 0.0
    %556 = vmatprep.subr.mxu0 0.0
    %557 = vmatpush1.msra.mxu0 0.0
    %558 = vmatprep.subr.mxu0 0.0
    %559 = vmatpush1.msra.mxu0 0.0
    %560 = vmatprep.subr.mxu0 0.0
    %561 = vmatpush1.msra.mxu0 0.0
    %562 = vmatprep.subr.mxu0 0.0
    %563 = vmatpush1.msra.mxu0 0.0
    %564 = vmatprep.mubr.f32.mxu0 0.0
    %565 = vmatmul.mubr.f32.gmra.mrb[0].mxu0 %v488
    %v566 = vpop.f32.mrb[0].mxu0
    %v567 = vadd.f32 0.0, %v566
    %v568 = vpop.f32.mrb[0].mxu0
    %v569 = vadd.f32 0.0, %v568
    %570 = vmatprep.mubr.f32.mxu0 0.0
    %571 = vmatmul.mubr.f32.gmra.mrb[0].mxu0 %v491
    %v572 = vpop.f32.mrb[0].mxu0
    %v573 = vadd.f32 0.0, %v572
    %v574 = vpop.f32.mrb[0].mxu0
    %v575 = vadd.f32 0.0, %v574
    %576 = vdwg.mxu0
    %577 = vmatprep.subr.mxu0 0.0
    %578 = vmatpush1.msra.mxu0 %v498
    %579 = vmatprep.subr.mxu0 0.0
    %580 = vmatpush1.msra.mxu0 0.0
    %581 = vmatprep.subr.mxu0 0.0
    %582 = vmatpush1.msra.mxu0 0.0
    %583 = vmatprep.subr.mxu0 0.0
    %584 = vmatpush1.msra.mxu0 0.0
    %585 = vmatprep.subr.mxu0 0.0
    %586 = vmatpush1.msra.mxu0 0.0
    %587 = vmatprep.subr.mxu0 0.0
    %588 = vmatpush1.msra.mxu0 0.0
    %589 = vmatprep.subr.mxu0 0.0
    %590 = vmatpush1.msra.mxu0 0.0
    %591 = vmatprep.subr.mxu0 0.0
    %592 = vmatpush1.msra.mxu0 0.0
    %593 = vmatprep.subr.mxu0 0.0
    %594 = vmatpush1.msra.mxu0 0.0
    %595 = vmatprep.subr.mxu0 0.0
    %596 = vmatpush1.msra.mxu0 0.0
    %597 = vmatprep.subr.mxu0 0.0
    %598 = vmatpush1.msra.mxu0 0.0
    %599 = vmatprep.subr.mxu0 0.0
    %600 = vmatpush1.msra.mxu0 0.0
    %601 = vmatprep.subr.mxu0 0.0
    %602 = vmatpush1.msra.mxu0 0.0
    %603 = vmatprep.subr.mxu0 0.0
    %604 = vmatpush1.msra.mxu0 0.0
    %605 = vmatprep.subr.mxu0 0.0
    %606 = vmatpush1.msra.mxu0 0.0
    %607 = vmatprep.subr.mxu0 0.0
    %608 = vmatpush1.msra.mxu0 0.0
    %609 = vmatprep.subr.mxu0 0.0
    %610 = vmatpush1.msra.mxu0 0.0
    %611 = vmatprep.subr.mxu0 0.0
    %612 = vmatpush1.msra.mxu0 0.0
    %613 = vmatprep.subr.mxu0 0.0
    %614 = vmatpush1.msra.mxu0 0.0
    %615 = vmatprep.subr.mxu0 0.0
    %616 = vmatpush1.msra.mxu0 0.0
    %617 = vmatprep.subr.mxu0 0.0
    %618 = vmatpush1.msra.mxu0 0.0
    %619 = vmatprep.subr.mxu0 0.0
    %620 = vmatpush1.msra.mxu0 0.0
    %621 = vmatprep.subr.mxu0 0.0
    %622 = vmatpush1.msra.mxu0 0.0
    %623 = vmatprep.subr.mxu0 0.0
    %624 = vmatpush1.msra.mxu0 0.0
    %625 = vmatprep.subr.mxu0 0.0
    %626 = vmatpush1.msra.mxu0 0.0
    %627 = vmatprep.subr.mxu0 0.0
    %628 = vmatpush1.msra.mxu0 0.0
    %629 = vmatprep.subr.mxu0 0.0
    %630 = vmatpush1.msra.mxu0 0.0
    %631 = vmatprep.subr.mxu0 0.0
    %632 = vmatpush1.msra.mxu0 0.0
    %633 = vmatprep.subr.mxu0 0.0
    %634 = vmatpush1.msra.mxu0 0.0
    %635 = vmatprep.subr.mxu0 0.0
    %636 = vmatpush1.msra.mxu0 0.0
    %637 = vmatprep.subr.mxu0 0.0
    %638 = vmatpush1.msra.mxu0 0.0
    %639 = vmatprep.subr.mxu0 0.0
    %640 = vmatpush1.msra.mxu0 0.0
    %641 = vmatprep.mubr.f32.mxu0 0.0
    %642 = vmatmul.mubr.f32.gmra.mrb[0].mxu0 %v488
    %v643 = vpop.f32.mrb[0].mxu0
    %v644 = vadd.f32 0.0, %v643
    %v645 = vpop.f32.mrb[0].mxu0
    %646 = vmatprep.mubr.f32.mxu0 0.0
    %647 = vmatmul.mubr.f32.gmra.mrb[0].mxu0 %v491
    %v648 = vpop.f32.mrb[0].mxu0
    %v649 = vadd.f32 0.0, %v648
    %v650 = vpop.f32.mrb[0].mxu0
    %651 = vdwg.mxu0
    %652 = vmatprep.subr.mxu0 %v288
    %653 = vmatpush1.msra.mxu0 %v287
    %654 = vmatprep.subr.mxu0 %v291
    %655 = vmatpush1.msra.mxu0 %v290
    %656 = vmatprep.subr.mxu0 %v294
    %657 = vmatpush1.msra.mxu0 %v293
    %658 = vmatprep.subr.mxu0 %v297
    %659 = vmatpush1.msra.mxu0 %v296
    %660 = vmatprep.subr.mxu0 %v300
    %661 = vmatpush1.msra.mxu0 %v299
    %662 = vmatprep.subr.mxu0 %v303
    %663 = vmatpush1.msra.mxu0 %v302
    %664 = vmatprep.subr.mxu0 %v306
    %665 = vmatpush1.msra.mxu0 %v305
    %666 = vmatprep.subr.mxu0 %v309
    %667 = vmatpush1.msra.mxu0 %v308
    %668 = vmatprep.subr.mxu0 %v312
    %669 = vmatpush1.msra.mxu0 %v311
    %670 = vmatprep.subr.mxu0 %v315
    %671 = vmatpush1.msra.mxu0 %v314
    %672 = vmatprep.subr.mxu0 %v318
    %673 = vmatpush1.msra.mxu0 %v317
    %674 = vmatprep.subr.mxu0 %v321
    %675 = vmatpush1.msra.mxu0 %v320
    %676 = vmatprep.subr.mxu0 %v324
    %677 = vmatpush1.msra.mxu0 %v323
    %678 = vmatprep.subr.mxu0 %v327
    %679 = vmatpush1.msra.mxu0 %v326
    %680 = vmatprep.subr.mxu0 %v330
    %681 = vmatpush1.msra.mxu0 %v329
    %682 = vmatprep.subr.mxu0 %v333
    %683 = vmatpush1.msra.mxu0 %v332
    %684 = vmatprep.subr.mxu0 %v336
    %685 = vmatpush1.msra.mxu0 %v335
    %686 = vmatprep.subr.mxu0 %v339
    %687 = vmatpush1.msra.mxu0 %v338
    %688 = vmatprep.subr.mxu0 %v342
    %689 = vmatpush1.msra.mxu0 %v341
    %690 = vmatprep.subr.mxu0 %v345
    %691 = vmatpush1.msra.mxu0 %v344
    %692 = vmatprep.subr.mxu0 %v348
    %693 = vmatpush1.msra.mxu0 %v347
    %694 = vmatprep.subr.mxu0 %v351
    %695 = vmatpush1.msra.mxu0 %v350
    %696 = vmatprep.subr.mxu0 %v354
    %697 = vmatpush1.msra.mxu0 %v353
    %698 = vmatprep.subr.mxu0 %v357
    %699 = vmatpush1.msra.mxu0 %v356
    %700 = vmatprep.subr.mxu0 %v360
    %701 = vmatpush1.msra.mxu0 %v359
    %702 = vmatprep.subr.mxu0 %v363
    %703 = vmatpush1.msra.mxu0 %v362
    %704 = vmatprep.subr.mxu0 %v366
    %705 = vmatpush1.msra.mxu0 %v365
    %706 = vmatprep.subr.mxu0 %v369
    %707 = vmatpush1.msra.mxu0 %v368
    %708 = vmatprep.subr.mxu0 %v372
    %709 = vmatpush1.msra.mxu0 %v371
    %710 = vmatprep.subr.mxu0 %v375
    %711 = vmatpush1.msra.mxu0 %v374
    %712 = vmatprep.subr.mxu0 %v378
    %713 = vmatpush1.msra.mxu0 %v377
    %714 = vmatprep.subr.mxu0 %v381
    %715 = vmatpush1.msra.mxu0 %v380
    %716 = vmatprep.mubr.f32.mxu0 %v280
    %717 = vmatmul.mubr.f32.gmra.mrb[0].mxu0 %v279
    %v718 = vpop.f32.mrb[0].mxu0
    %v719 = vadd.f32 %v567, %v718
    %v720 = vpop.f32.mrb[0].mxu0
    %v721 = vadd.f32 %v569, %v720
    %722 = vmatprep.mubr.f32.mxu0 %v284
    %723 = vmatmul.mubr.f32.gmra.mrb[0].mxu0 %v283
    %v724 = vpop.f32.mrb[0].mxu0
    %v725 = vadd.f32 %v573, %v724
    %v726 = vpop.f32.mrb[0].mxu0
    %v727 = vadd.f32 %v575, %v726
    %728 = vdwg.mxu0
    %729 = vmatprep.subr.mxu0 %v384
    %730 = vmatpush1.msra.mxu0 %v383
    %731 = vmatprep.subr.mxu0 %v387
    %732 = vmatpush1.msra.mxu0 %v386
    %733 = vmatprep.subr.mxu0 %v390
    %734 = vmatpush1.msra.mxu0 %v389
    %735 = vmatprep.subr.mxu0 %v393
    %736 = vmatpush1.msra.mxu0 %v392
    %737 = vmatprep.subr.mxu0 %v396
    %738 = vmatpush1.msra.mxu0 %v395
    %739 = vmatprep.subr.mxu0 %v399
    %740 = vmatpush1.msra.mxu0 %v398
    %741 = vmatprep.subr.mxu0 %v402
    %742 = vmatpush1.msra.mxu0 %v401
    %743 = vmatprep.subr.mxu0 %v405
    %744 = vmatpush1.msra.mxu0 %v404
    %745 = vmatprep.subr.mxu0 %v408
    %746 = vmatpush1.msra.mxu0 %v407
    %747 = vmatprep.subr.mxu0 %v411
    %748 = vmatpush1.msra.mxu0 %v410
    %749 = vmatprep.subr.mxu0 %v414
    %750 = vmatpush1.msra.mxu0 %v413
    %751 = vmatprep.subr.mxu0 %v417
    %752 = vmatpush1.msra.mxu0 %v416
    %753 = vmatprep.subr.mxu0 %v420
    %754 = vmatpush1.msra.mxu0 %v419
    %755 = vmatprep.subr.mxu0 %v423
    %756 = vmatpush1.msra.mxu0 %v422
    %757 = vmatprep.subr.mxu0 %v426
    %758 = vmatpush1.msra.mxu0 %v425
    %759 = vmatprep.subr.mxu0 %v429
    %760 = vmatpush1.msra.mxu0 %v428
    %761 = vmatprep.subr.mxu0 %v432
    %762 = vmatpush1.msra.mxu0 %v431
    %763 = vmatprep.subr.mxu0 %v435
    %764 = vmatpush1.msra.mxu0 %v434
    %765 = vmatprep.subr.mxu0 %v438
    %766 = vmatpush1.msra.mxu0 %v437
    %767 = vmatprep.subr.mxu0 %v441
    %768 = vmatpush1.msra.mxu0 %v440
    %769 = vmatprep.subr.mxu0 %v444
    %770 = vmatpush1.msra.mxu0 %v443
    %771 = vmatprep.subr.mxu0 %v447
    %772 = vmatpush1.msra.mxu0 %v446
    %773 = vmatprep.subr.mxu0 %v450
    %774 = vmatpush1.msra.mxu0 %v449
    %775 = vmatprep.subr.mxu0 %v453
    %776 = vmatpush1.msra.mxu0 %v452
    %777 = vmatprep.subr.mxu0 %v456
    %778 = vmatpush1.msra.mxu0 %v455
    %779 = vmatprep.subr.mxu0 %v459
    %780 = vmatpush1.msra.mxu0 %v458
    %781 = vmatprep.subr.mxu0 %v462
    %782 = vmatpush1.msra.mxu0 %v461
    %783 = vmatprep.subr.mxu0 %v465
    %784 = vmatpush1.msra.mxu0 %v464
    %785 = vmatprep.subr.mxu0 %v468
    %786 = vmatpush1.msra.mxu0 %v467
    %787 = vmatprep.subr.mxu0 %v471
    %788 = vmatpush1.msra.mxu0 %v470
    %789 = vmatprep.subr.mxu0 %v474
    %790 = vmatpush1.msra.mxu0 %v473
    %791 = vmatprep.subr.mxu0 %v477
    %792 = vmatpush1.msra.mxu0 %v476
    %793 = vmatprep.mubr.f32.mxu0 %v282
    %794 = vmatmul.mubr.f32.gmra.mrb[0].mxu0 %v281
    %v795 = vpop.f32.mrb[0].mxu0
    %v796 = vadd.f32 %v719, %v795
    %v797 = vpop.f32.mrb[0].mxu0
    %v798 = vadd.f32 %v721, %v797
    %799 = vmatprep.mubr.f32.mxu0 %v286
    %800 = vmatmul.mubr.f32.gmra.mrb[0].mxu0 %v285
    %v801 = vpop.f32.mrb[0].mxu0
    %v802 = vadd.f32 %v725, %v801
    %v803 = vpop.f32.mrb[0].mxu0
    %v804 = vadd.f32 %v727, %v803
    %805 = vdwg.mxu0
    %806 = vmatprep.subr.mxu0 0.0
    %807 = vmatpush1.msra.mxu0 %v289
    %808 = vmatprep.subr.mxu0 0.0
    %809 = vmatpush1.msra.mxu0 %v292
    %810 = vmatprep.subr.mxu0 0.0
    %811 = vmatpush1.msra.mxu0 %v295
    %812 = vmatprep.subr.mxu0 0.0
    %813 = vmatpush1.msra.mxu0 %v298
    %814 = vmatprep.subr.mxu0 0.0
    %815 = vmatpush1.msra.mxu0 %v301
    %816 = vmatprep.subr.mxu0 0.0
    %817 = vmatpush1.msra.mxu0 %v304
    %818 = vmatprep.subr.mxu0 0.0
    %819 = vmatpush1.msra.mxu0 %v307
    %820 = vmatprep.subr.mxu0 0.0
    %821 = vmatpush1.msra.mxu0 %v310
    %822 = vmatprep.subr.mxu0 0.0
    %823 = vmatpush1.msra.mxu0 %v313
    %824 = vmatprep.subr.mxu0 0.0
    %825 = vmatpush1.msra.mxu0 %v316
    %826 = vmatprep.subr.mxu0 0.0
    %827 = vmatpush1.msra.mxu0 %v319
    %828 = vmatprep.subr.mxu0 0.0
    %829 = vmatpush1.msra.mxu0 %v322
    %830 = vmatprep.subr.mxu0 0.0
    %831 = vmatpush1.msra.mxu0 %v325
    %832 = vmatprep.subr.mxu0 0.0
    %833 = vmatpush1.msra.mxu0 %v328
    %834 = vmatprep.subr.mxu0 0.0
    %835 = vmatpush1.msra.mxu0 %v331
    %836 = vmatprep.subr.mxu0 0.0
    %837 = vmatpush1.msra.mxu0 %v334
    %838 = vmatprep.subr.mxu0 0.0
    %839 = vmatpush1.msra.mxu0 %v337
    %840 = vmatprep.subr.mxu0 0.0
    %841 = vmatpush1.msra.mxu0 %v340
    %842 = vmatprep.subr.mxu0 0.0
    %843 = vmatpush1.msra.mxu0 %v343
    %844 = vmatprep.subr.mxu0 0.0
    %845 = vmatpush1.msra.mxu0 %v346
    %846 = vmatprep.subr.mxu0 0.0
    %847 = vmatpush1.msra.mxu0 %v349
    %848 = vmatprep.subr.mxu0 0.0
    %849 = vmatpush1.msra.mxu0 %v352
    %850 = vmatprep.subr.mxu0 0.0
    %851 = vmatpush1.msra.mxu0 %v355
    %852 = vmatprep.subr.mxu0 0.0
    %853 = vmatpush1.msra.mxu0 %v358
    %854 = vmatprep.subr.mxu0 0.0
    %855 = vmatpush1.msra.mxu0 %v361
    %856 = vmatprep.subr.mxu0 0.0
    %857 = vmatpush1.msra.mxu0 %v364
    %858 = vmatprep.subr.mxu0 0.0
    %859 = vmatpush1.msra.mxu0 %v367
    %860 = vmatprep.subr.mxu0 0.0
    %861 = vmatpush1.msra.mxu0 %v370
    %862 = vmatprep.subr.mxu0 0.0
    %863 = vmatpush1.msra.mxu0 %v373
    %864 = vmatprep.subr.mxu0 0.0
    %865 = vmatpush1.msra.mxu0 %v376
    %866 = vmatprep.subr.mxu0 0.0
    %867 = vmatpush1.msra.mxu0 %v379
    %868 = vmatprep.subr.mxu0 0.0
    %869 = vmatpush1.msra.mxu0 %v382
    %870 = vmatprep.mubr.f32.mxu0 %v280
    %871 = vmatmul.mubr.f32.gmra.mrb[0].mxu0 %v279
    %v872 = vpop.f32.mrb[0].mxu0
    %v873 = vadd.f32 %v644, %v872
    %v874 = vpop.f32.mrb[0].mxu0
    %875 = vmatprep.mubr.f32.mxu0 %v284
    %876 = vmatmul.mubr.f32.gmra.mrb[0].mxu0 %v283
    %v877 = vpop.f32.mrb[0].mxu0
    %v878 = vadd.f32 %v649, %v877
    %v879 = vpop.f32.mrb[0].mxu0
    %880 = vdwg.mxu0
    %881 = vmatprep.subr.mxu0 0.0
    %882 = vmatpush1.msra.mxu0 %v385
    %883 = vmatprep.subr.mxu0 0.0
    %884 = vmatpush1.msra.mxu0 %v388
    %885 = vmatprep.subr.mxu0 0.0
    %886 = vmatpush1.msra.mxu0 %v391
    %887 = vmatprep.subr.mxu0 0.0
    %888 = vmatpush1.msra.mxu0 %v394
    %889 = vmatprep.subr.mxu0 0.0
    %890 = vmatpush1.msra.mxu0 %v397
    %891 = vmatprep.subr.mxu0 0.0
    %892 = vmatpush1.msra.mxu0 %v400
    %893 = vmatprep.subr.mxu0 0.0
    %894 = vmatpush1.msra.mxu0 %v403
    %895 = vmatprep.subr.mxu0 0.0
    %896 = vmatpush1.msra.mxu0 %v406
    %897 = vmatprep.subr.mxu0 0.0
    %898 = vmatpush1.msra.mxu0 %v409
    %899 = vmatprep.subr.mxu0 0.0
    %900 = vmatpush1.msra.mxu0 %v412
    %901 = vmatprep.subr.mxu0 0.0
    %902 = vmatpush1.msra.mxu0 %v415
    %903 = vmatprep.subr.mxu0 0.0
    %904 = vmatpush1.msra.mxu0 %v418
    %905 = vmatprep.subr.mxu0 0.0
    %906 = vmatpush1.msra.mxu0 %v421
    %907 = vmatprep.subr.mxu0 0.0
    %908 = vmatpush1.msra.mxu0 %v424
    %909 = vmatprep.subr.mxu0 0.0
    %910 = vmatpush1.msra.mxu0 %v427
    %911 = vmatprep.subr.mxu0 0.0
    %912 = vmatpush1.msra.mxu0 %v430
    %913 = vmatprep.subr.mxu0 0.0
    %914 = vmatpush1.msra.mxu0 %v433
    %915 = vmatprep.subr.mxu0 0.0
    %916 = vmatpush1.msra.mxu0 %v436
    %917 = vmatprep.subr.mxu0 0.0
    %918 = vmatpush1.msra.mxu0 %v439
    %919 = vmatprep.subr.mxu0 0.0
    %920 = vmatpush1.msra.mxu0 %v442
    %921 = vmatprep.subr.mxu0 0.0
    %922 = vmatpush1.msra.mxu0 %v445
    %923 = vmatprep.subr.mxu0 0.0
    %924 = vmatpush1.msra.mxu0 %v448
    %925 = vmatprep.subr.mxu0 0.0
    %926 = vmatpush1.msra.mxu0 %v451
    %927 = vmatprep.subr.mxu0 0.0
    %928 = vmatpush1.msra.mxu0 %v454
    %929 = vmatprep.subr.mxu0 0.0
    %930 = vmatpush1.msra.mxu0 %v457
    %931 = vmatprep.subr.mxu0 0.0
    %932 = vmatpush1.msra.mxu0 %v460
    %933 = vmatprep.subr.mxu0 0.0
    %934 = vmatpush1.msra.mxu0 %v463
    %935 = vmatprep.subr.mxu0 0.0
    %936 = vmatpush1.msra.mxu0 %v466
    %937 = vmatprep.subr.mxu0 0.0
    %938 = vmatpush1.msra.mxu0 %v469
    %939 = vmatprep.subr.mxu0 0.0
    %940 = vmatpush1.msra.mxu0 %v472
    %941 = vmatprep.subr.mxu0 0.0
    %942 = vmatpush1.msra.mxu0 %v475
    %943 = vmatprep.subr.mxu0 0.0
    %944 = vmatpush1.msra.mxu0 %v478
    %945 = vmatprep.mubr.f32.mxu0 %v282
    %946 = vmatmul.mubr.f32.gmra.mrb[0].mxu0 %v281
    %v947 = vpop.f32.mrb[0].mxu0
    %v948 = vadd.f32 %v873, %v947
    %v949 = vpop.f32.mrb[0].mxu0
    %950 = vmatprep.mubr.f32.mxu0 %v286
    %951 = vmatmul.mubr.f32.gmra.mrb[0].mxu0 %v285
    %v952 = vpop.f32.mrb[0].mxu0
    %v953 = vadd.f32 %v878, %v952
    %v954 = vpop.f32.mrb[0].mxu0
    %955 = vdwg.mxu0
    %v956 = vld [vmem:[%s6] sm:$0x7]
    %v958 = vlaneseq
    %v959 = vshrl.u32 %v958, 7
    %v960 = vsub.s32 0, %v959
    %v961 = vrot.slane %v956, %v960
    %v962 = vlaneseq
    %v963 = vshrl.u32 %v962, 7
    %v964 = vsub.s32 1, %v963
    %v965 = vrot.slane %v956, %v964
    %v966 = vlaneseq
    %v967 = vshrl.u32 %v966, 7
    %v968 = vsub.s32 2, %v967
    %v969 = vrot.slane %v956, %v968
    %v973 = vadd.f32 %v796, %v961
    %v974 = vadd.f32 %v798, %v965
    %v975 = vadd.f32 %v948, %v969
    %v976 = vadd.f32 %v802, %v961
    %v977 = vadd.f32 %v804, %v965
    %v978 = vadd.f32 %v953, %v969
    %v979 = vmax.f32 %v973, 0.0
    %v980 = vmax.f32 %v974, 0.0
    %v981 = vmax.f32 %v975, 0.0
    %v982 = vmax.f32 %v976, 0.0
    %v983 = vmax.f32 %v977, 0.0
    %v984 = vmax.f32 %v978, 0.0
    %v985 = vld [vmem:[#allocation8] sm:$0xff]
    %v986 = vld [vmem:[#allocation8 + $0x8] sm:$0xff]
    %v987 = vld [vmem:[#allocation8 + $0x10] sm:$0xff]
    %v988 = vld [vmem:[#allocation8 + $0x18] sm:$0xff]
    %v989 = vld [vmem:[#allocation8 + $0x20] sm:$0xff]
    %v990 = vld [vmem:[#allocation8 + $0x28] sm:$0xff]
    %v991 = vld [vmem:[#allocation8 + $0x30] sm:$0xff]
    %v992 = vld [vmem:[#allocation8 + $0x38] sm:$0xff]
    %v993 = vld [vmem:[#allocation8 + $0x40] sm:$0xff]
    %v994 = vld [vmem:[#allocation8 + $0x48] sm:$0xff]
    %v995 = vld [vmem:[#allocation8 + $0x50] sm:$0xff]
    %v996 = vld [vmem:[#allocation8 + $0x58] sm:$0xff]
    %v997 = vld [vmem:[#allocation8 + $0x60] sm:$0xff]
    %v998 = vld [vmem:[#allocation8 + $0x68] sm:$0xff]
    %v999 = vld [vmem:[#allocation8 + $0x70] sm:$0xff]
    %v1000 = vld [vmem:[#allocation8 + $0x78] sm:$0xff]
    %v1001 = vld [vmem:[#allocation8 + $0x80] sm:$0xff]
    %v1002 = vld [vmem:[#allocation8 + $0x88] sm:$0xff]
    %v1003 = vld [vmem:[#allocation8 + $0x90] sm:$0xff]
    %v1004 = vld [vmem:[#allocation8 + $0x98] sm:$0xff]
    %v1005 = vld [vmem:[#allocation8 + $0xa0] sm:$0xff]
    %v1006 = vld [vmem:[#allocation8 + $0xa8] sm:$0xff]
    %v1007 = vld [vmem:[#allocation8 + $0xb0] sm:$0xff]
    %v1008 = vld [vmem:[#allocation8 + $0xb8] sm:$0xff]
    %v1009 = vld [vmem:[#allocation8 + $0xc0] sm:$0xff]
    %v1010 = vld [vmem:[#allocation8 + $0xc8] sm:$0xff]
    %v1011 = vld [vmem:[#allocation8 + $0xd0] sm:$0xff]
    %v1012 = vld [vmem:[#allocation8 + $0xd8] sm:$0xff]
    %v1013 = vld [vmem:[#allocation8 + $0xe0] sm:$0xff]
    %v1014 = vld [vmem:[#allocation8 + $0xe8] sm:$0xff]
    %v1015 = vld [vmem:[#allocation8 + $0xf0] sm:$0xff]
    %v1016 = vld [vmem:[#allocation8 + $0xf8] sm:$0xff]
    %v1017 = vld [vmem:[#allocation8 + $0x100] sm:$0xff]
    %v1018 = vld [vmem:[#allocation8 + $0x108] sm:$0xff]
    %v1019 = vld [vmem:[#allocation8 + $0x110] sm:$0xff]
    %v1020 = vld [vmem:[#allocation8 + $0x118] sm:$0xff]
    %v1021 = vld [vmem:[#allocation8 + $0x120] sm:$0xff]
    %v1022 = vld [vmem:[#allocation8 + $0x128] sm:$0xff]
    %v1023 = vld [vmem:[#allocation8 + $0x130] sm:$0xff]
    %v1024 = vld [vmem:[#allocation8 + $0x138] sm:$0xff]
    %v1025 = vld [vmem:[#allocation8 + $0x140] sm:$0xff]
    %v1026 = vld [vmem:[#allocation8 + $0x148] sm:$0xff]
    %v1027 = vld [vmem:[#allocation8 + $0x150] sm:$0xff]
    %v1028 = vld [vmem:[#allocation8 + $0x158] sm:$0xff]
    %v1029 = vld [vmem:[#allocation8 + $0x160] sm:$0xff]
    %v1030 = vld [vmem:[#allocation8 + $0x168] sm:$0xff]
    %v1031 = vld [vmem:[#allocation8 + $0x170] sm:$0xff]
    %v1032 = vld [vmem:[#allocation8 + $0x178] sm:$0xff]
    %v1033 = vld [vmem:[%s8] sm:$0x1]
    %v1035 = vlaneseq
    %v1036 = vshrl.u32 %v1035, 7
    %v1037 = vsub.s32 0, %v1036
    %v1038 = vrot.slane %v1033, %v1037
    %1040 = vmatprep.subr.mxu0 0.0
    %1041 = vmatpush1.msra.mxu0 %v985
    %1042 = vmatprep.subr.mxu0 0.0
    %1043 = vmatpush1.msra.mxu0 %v986
    %1044 = vmatprep.subr.mxu0 0.0
    %1045 = vmatpush1.msra.mxu0 %v987
    %1046 = vmatprep.subr.mxu0 0.0
    %1047 = vmatpush1.msra.mxu0 %v988
    %1048 = vmatprep.subr.mxu0 0.0
    %1049 = vmatpush1.msra.mxu0 %v989
    %1050 = vmatprep.subr.mxu0 0.0
    %1051 = vmatpush1.msra.mxu0 %v990
    %1052 = vmatprep.subr.mxu0 0.0
    %1053 = vmatpush1.msra.mxu0 %v991
    %1054 = vmatprep.subr.mxu0 0.0
    %1055 = vmatpush1.msra.mxu0 %v992
    %1056 = vmatprep.subr.mxu0 0.0
    %1057 = vmatpush1.msra.mxu0 %v993
    %1058 = vmatprep.subr.mxu0 0.0
    %1059 = vmatpush1.msra.mxu0 %v994
    %1060 = vmatprep.subr.mxu0 0.0
    %1061 = vmatpush1.msra.mxu0 %v995
    %1062 = vmatprep.subr.mxu0 0.0
    %1063 = vmatpush1.msra.mxu0 %v996
    %1064 = vmatprep.subr.mxu0 0.0
    %1065 = vmatpush1.msra.mxu0 %v997
    %1066 = vmatprep.subr.mxu0 0.0
    %1067 = vmatpush1.msra.mxu0 %v998
    %1068 = vmatprep.subr.mxu0 0.0
    %1069 = vmatpush1.msra.mxu0 %v999
    %1070 = vmatprep.subr.mxu0 0.0
    %1071 = vmatpush1.msra.mxu0 %v1000
    %1072 = vmatprep.subr.mxu0 0.0
    %1073 = vmatpush1.msra.mxu0 %v1001
    %1074 = vmatprep.subr.mxu0 0.0
    %1075 = vmatpush1.msra.mxu0 %v1002
    %1076 = vmatprep.subr.mxu0 0.0
    %1077 = vmatpush1.msra.mxu0 %v1003
    %1078 = vmatprep.subr.mxu0 0.0
    %1079 = vmatpush1.msra.mxu0 %v1004
    %1080 = vmatprep.subr.mxu0 0.0
    %1081 = vmatpush1.msra.mxu0 %v1005
    %1082 = vmatprep.subr.mxu0 0.0
    %1083 = vmatpush1.msra.mxu0 %v1006
    %1084 = vmatprep.subr.mxu0 0.0
    %1085 = vmatpush1.msra.mxu0 %v1007
    %1086 = vmatprep.subr.mxu0 0.0
    %1087 = vmatpush1.msra.mxu0 %v1008
    %1088 = vmatprep.subr.mxu0 0.0
    %1089 = vmatpush1.msra.mxu0 %v1009
    %1090 = vmatprep.subr.mxu0 0.0
    %1091 = vmatpush1.msra.mxu0 %v1010
    %1092 = vmatprep.subr.mxu0 0.0
    %1093 = vmatpush1.msra.mxu0 %v1011
    %1094 = vmatprep.subr.mxu0 0.0
    %1095 = vmatpush1.msra.mxu0 %v1012
    %1096 = vmatprep.subr.mxu0 0.0
    %1097 = vmatpush1.msra.mxu0 %v1013
    %1098 = vmatprep.subr.mxu0 0.0
    %1099 = vmatpush1.msra.mxu0 %v1014
    %1100 = vmatprep.subr.mxu0 0.0
    %1101 = vmatpush1.msra.mxu0 %v1015
    %1102 = vmatprep.subr.mxu0 0.0
    %1103 = vmatpush1.msra.mxu0 %v1016
    %1104 = vmatprep.mubr.f32.mxu0 %v980
    %1105 = vmatmul.mubr.f32.gmra.mrb[0].mxu0 %v979
    %v1106 = vpop.f32.mrb[0].mxu0
    %v1107 = vadd.f32 %v1038, %v1106
    %v1108 = vpop.f32.mrb[0].mxu0
    %1109 = vmatprep.mubr.f32.mxu0 %v983
    %1110 = vmatmul.mubr.f32.gmra.mrb[0].mxu0 %v982
    %v1111 = vpop.f32.mrb[0].mxu0
    %v1112 = vadd.f32 %v1038, %v1111
    %v1113 = vpop.f32.mrb[0].mxu0
    %1114 = vdwg.mxu0
    %1115 = vmatprep.subr.mxu0 0.0
    %1116 = vmatpush1.msra.mxu0 %v1017
    %1117 = vmatprep.subr.mxu0 0.0
    %1118 = vmatpush1.msra.mxu0 %v1018
    %1119 = vmatprep.subr.mxu0 0.0
    %1120 = vmatpush1.msra.mxu0 %v1019
    %1121 = vmatprep.subr.mxu0 0.0
    %1122 = vmatpush1.msra.mxu0 %v1020
    %1123 = vmatprep.subr.mxu0 0.0
    %1124 = vmatpush1.msra.mxu0 %v1021
    %1125 = vmatprep.subr.mxu0 0.0
    %1126 = vmatpush1.msra.mxu0 %v1022
    %1127 = vmatprep.subr.mxu0 0.0
    %1128 = vmatpush1.msra.mxu0 %v1023
    %1129 = vmatprep.subr.mxu0 0.0
    %1130 = vmatpush1.msra.mxu0 %v1024
    %1131 = vmatprep.subr.mxu0 0.0
    %1132 = vmatpush1.msra.mxu0 %v1025
    %1133 = vmatprep.subr.mxu0 0.0
    %1134 = vmatpush1.msra.mxu0 %v1026
    %1135 = vmatprep.subr.mxu0 0.0
    %1136 = vmatpush1.msra.mxu0 %v1027
    %1137 = vmatprep.subr.mxu0 0.0
    %1138 = vmatpush1.msra.mxu0 %v1028
    %1139 = vmatprep.subr.mxu0 0.0
    %1140 = vmatpush1.msra.mxu0 %v1029
    %1141 = vmatprep.subr.mxu0 0.0
    %1142 = vmatpush1.msra.mxu0 %v1030
    %1143 = vmatprep.subr.mxu0 0.0
    %1144 = vmatpush1.msra.mxu0 %v1031
    %1145 = vmatprep.subr.mxu0 0.0
    %1146 = vmatpush1.msra.mxu0 %v1032
    %1147 = vmatprep.subr.mxu0 0.0
    %1148 = vmatpush1.msra.mxu0 0.0
    %1149 = vmatprep.subr.mxu0 0.0
    %1150 = vmatpush1.msra.mxu0 0.0
    %1151 = vmatprep.subr.mxu0 0.0
    %1152 = vmatpush1.msra.mxu0 0.0
    %1153 = vmatprep.subr.mxu0 0.0
    %1154 = vmatpush1.msra.mxu0 0.0
    %1155 = vmatprep.subr.mxu0 0.0
    %1156 = vmatpush1.msra.mxu0 0.0
    %1157 = vmatprep.subr.mxu0 0.0
    %1158 = vmatpush1.msra.mxu0 0.0
    %1159 = vmatprep.subr.mxu0 0.0
    %1160 = vmatpush1.msra.mxu0 0.0
    %1161 = vmatprep.subr.mxu0 0.0
    %1162 = vmatpush1.msra.mxu0 0.0
    %1163 = vmatprep.subr.mxu0 0.0
    %1164 = vmatpush1.msra.mxu0 0.0
    %1165 = vmatprep.subr.mxu0 0.0
    %1166 = vmatpush1.msra.mxu0 0.0
    %1167 = vmatprep.subr.mxu0 0.0
    %1168 = vmatpush1.msra.mxu0 0.0
    %1169 = vmatprep.subr.mxu0 0.0
    %1170 = vmatpush1.msra.mxu0 0.0
    %1171 = vmatprep.subr.mxu0 0.0
    %1172 = vmatpush1.msra.mxu0 0.0
    %1173 = vmatprep.subr.mxu0 0.0
    %1174 = vmatpush1.msra.mxu0 0.0
    %1175 = vmatprep.subr.mxu0 0.0
    %1176 = vmatpush1.msra.mxu0 0.0
    %1177 = vmatprep.subr.mxu0 0.0
    %1178 = vmatpush1.msra.mxu0 0.0
    %1179 = vmatprep.mubr.f32.mxu0 0.0
    %1180 = vmatmul.mubr.f32.gmra.mrb[0].mxu0 %v981
    %v1181 = vpop.f32.mrb[0].mxu0
    %v1182 = vadd.f32 %v1107, %v1181
    %v1183 = vpop.f32.mrb[0].mxu0
    %1184 = vmatprep.mubr.f32.mxu0 0.0
    %1185 = vmatmul.mubr.f32.gmra.mrb[0].mxu0 %v984
    %v1186 = vpop.f32.mrb[0].mxu0
    %v1187 = vadd.f32 %v1112, %v1186
    %v1188 = vpop.f32.mrb[0].mxu0
    %1189 = vdwg.mxu0
    %1190 = vmax.xlane.f32.xlu0 %v1182
    %v1191 = vpop.xlane.xlu0 %1190
    %1192 = vmax.xlane.f32.xlu0 %v1187
    %v1193 = vpop.xlane.xlu0 %1192
    %v1194 = vsub.f32 %v1182, %v1191
    %v1195 = vsub.f32 %v1187, %v1193
    %v1196 = vmul.f32 %v1194, 1.442695
    %v1197 = vpow.pop %v1196
    %v1198 = vmul.f32 %v1195, 1.442695
    %v1199 = vpow.pop %v1198
    %1200 = vadd.xlane.f32.xlu0 %v1197
    %v1201 = vpop.xlane.xlu0 %1200
    %1202 = vadd.xlane.f32.xlu0 %v1199
    %v1203 = vpop.xlane.xlu0 %1202
    %v1204 = vrcp.pop %v1201
    %v1205 = vmul.f32 %v1197, %v1204
    %v1206 = vrcp.pop %v1203
    %v1207 = vmul.f32 %v1199, %v1206
    %1208 = vst [vmem:[#allocation10] sm:$0xff] %v1205
    %1209 = vst [vmem:[#allocation10 + $0x8] sm:$0xff] %v1207
    // Predicated region
    $region54: #{tpu_custom_call.1} parent=1 // pred_check
      _
    $region55: #{tpu_custom_call.1} parent=1 // pred_check_branch
      %1211 = sbr.rel (0) target = $region57
    $region56: #{tpu_custom_call.1} parent=1 // pred_region
      %s1213 = ssub.s32 256, 256
      %1214 = vsyncadd [#allocation4], %s1213
      %s1215 = sshll.u32 [#allocation10], 4
      %s1216 = int_to_ptr.vmem [resolvable:$true] %s1215
      %1221 = dma.vmem_to_hbm [thread:$0]  %s1216, 256, %s9, [#allocation4], 128, 128, 8
    $region57: #{tpu_custom_call.1} parent=1 // pred_fallthru
      _
    // Predicated region
    $region58: #{tpu_custom_call.1} parent=1 // pred_check
      _
    $region59: #{tpu_custom_call.1} parent=1 // pred_check_branch
      %1223 = sbr.rel (0) target = $region61
    $region60: #{tpu_custom_call.1} parent=1 // pred_region
      %1224 = dma.done [#allocation4], 256
    $region61: #{tpu_custom_call.1} parent=1 // pred_fallthru
      _
    %1225 = vsyncpa [#allocation3], 1
    %1226 = vsyncpa [#allocation6], 1
    %1227 = vsyncpa [#allocation9], 1
    %1228 = vsyncpa [#allocation4], 1

</llo_original>
